<compile_context>
chip_gen: v7x
topology: tpu7x:2x2x1
jax: 0.10.0
libtpu: 0.0.40
codegen_flags: <defaults>
</compile_context>

<pallas_src>
import functools

import jax
import jax.numpy as jnp
import numpy as np
from jax.experimental import pallas as pl
from jax.experimental.pallas import tpu as pltpu


def _gru_chunk_kernel(gi_ref, whh_ref, bhh_ref, out_ref, h_scratch):
    """One time-chunk of the GRU recurrence.

    grid = (batch_blocks, time_chunks); axis 1 (time) is sequential and the
    hidden state is carried across its iterations in `h_scratch`.
      gi_ref  : [Tc, Bt, 3H] f32   precomputed  x_t @ W_ih + b_ih
      whh_ref : [H, 3H]      bf16  recurrent weight (resident)
      bhh_ref : [1, 3H]      f32   recurrent bias   (resident)
      out_ref : [Tc, Bt, H]  f32   per-step hidden states
    """
    t = pl.program_id(1)

    @pl.when(t == 0)
    def _():
        h_scratch[...] = jnp.zeros_like(h_scratch)

    Tc = gi_ref.shape[0]
    Bt, H = h_scratch.shape

    w_hh = whh_ref[...]                                   # load once per chunk
    # Hoist the bias broadcast out of the unrolled time loop (no CSE in JAX).
    b_hh = jnp.broadcast_to(bhh_ref[...], (Bt, 3 * H)).astype(jnp.float32)

    def step(i, h):
        gi = gi_ref[i]                                              # [Bt, 3H]
        gh = jnp.dot(h.astype(w_hh.dtype), w_hh,
                     preferred_element_type=jnp.float32) + b_hh     # [Bt, 3H]
        r = jax.nn.sigmoid(gi[:, 0:H] + gh[:, 0:H])
        z = jax.nn.sigmoid(gi[:, H:2 * H] + gh[:, H:2 * H])
        n = jnp.tanh(gi[:, 2 * H:3 * H] + r * gh[:, 2 * H:3 * H])
        h_new = (1.0 - z) * n + z * h
        out_ref[i] = h_new.astype(out_ref.dtype)
        return h_new

    h_scratch[...] = jax.lax.fori_loop(0, Tc, step, h_scratch[...], unroll=True)


@functools.lru_cache(maxsize=None)
def _build_recurrence_call(s_pad, b_pad, b_tile, t_chunk, hid_dim,
                           single_buffer_weights):
    """Builds the pallas_call for the recurrent part (operates on precomputed gi)."""
    H = hid_dim
    weight_kwargs = {}
    if single_buffer_weights:
        # Constant index_map -> the weights never change across grid steps,
        # so a single VMEM buffer suffices (halves resident-weight VMEM).
        weight_kwargs = dict(pipeline_mode=pl.Buffered(1))

    grid_spec = pltpu.PrefetchScalarGridSpec(
        num_scalar_prefetch=0,
        grid=(b_pad // b_tile, s_pad // t_chunk),          # (batch, time)
        in_specs=[
            pl.BlockSpec((t_chunk, b_tile, 3 * H), lambda b, t: (t, b, 0)),
            pl.BlockSpec((H, 3 * H), lambda b, t: (0, 0), **weight_kwargs),
            pl.BlockSpec((1, 3 * H), lambda b, t: (0, 0), **weight_kwargs),
        ],
        out_specs=pl.BlockSpec((t_chunk, b_tile, H), lambda b, t: (t, b, 0)),
        scratch_shapes=[pltpu.VMEM((b_tile, H), jnp.float32)],   # carried h
    )
    return pl.pallas_call(
        _gru_chunk_kernel,
        out_shape=jax.ShapeDtypeStruct((s_pad, b_pad, H), jnp.float32),
        grid_spec=grid_spec,
        compiler_params=pltpu.CompilerParams(
            # batch blocks are independent (megacore-shardable on v7x);
            # time carries the hidden state -> sequential.
            dimension_semantics=("parallel", "arbitrary"),
            vmem_limit_bytes=48 * 1024 * 1024,
        ),
    )


def _pick_batch_tile(b_pad):
    # Prefer >=2 batch blocks (lets v7x's two TensorCores split the work) as
    # long as each block stays sublane-aligned (multiple of 8).
    if b_pad % 2 == 0 and (b_pad // 2) % 8 == 0:
        return b_pad // 2
    return b_pad


def gru_encoder_pallas(src, w_ih, w_hh, b_ih, b_hh, *, time_chunk=8):
    """src: [S, B, E] f32.  Returns (outputs [S, B, H] f32, hidden [B, H] f32)."""
    S, B, E = src.shape
    H = w_hh.shape[0]

    # Pad batch to a sublane multiple (8) and time to a chunk multiple; padded
    # rows/steps are computed then dropped (h0 = 0 keeps them harmless).
    Bp = ((B + 7) // 8) * 8
    Tc = min(time_chunk, S)
    Sp = ((S + Tc - 1) // Tc) * Tc
    src_p = jnp.pad(src, ((0, Sp - S), (0, Bp - B), (0, 0)))

    # Hoisted input projection: one big MXU matmul over all timesteps (XLA).
    gi = jnp.dot(src_p.reshape(Sp * Bp, E).astype(w_ih.dtype), w_ih,
                 preferred_element_type=jnp.float32)
    gi = (gi + b_ih.astype(jnp.float32)).reshape(Sp, Bp, 3 * H)

    Bt = _pick_batch_tile(Bp)

    try:
        out_p = _build_recurrence_call(Sp, Bp, Bt, Tc, H, True)(gi, w_hh, b_hh)
    except Exception:
        # TODO(synk): fallback if pl.Buffered(1) single-buffering is rejected
        # by this jax/Mosaic version; uses default double-buffered weights.
        out_p = _build_recurrence_call(Sp, Bp, Bt, Tc, H, False)(gi, w_hh, b_hh)

    outputs = out_p[:S, :B]
    hidden = out_p[S - 1, :B]          # final hidden == last real output step
    return outputs, hidden


class Encoder:
    """JAX/Pallas mirror of the (stub) PyTorch Encoder: GRU(emb_dim, hid_dim)."""

    def __init__(self, emb_dim, hid_dim, dropout, key):
        self.emb_dim = emb_dim
        self.hid_dim = hid_dim
        self.dropout = dropout  # eval mode -> identity
        k = 1.0 / np.sqrt(hid_dim)
        k1, k2, k3, k4 = jax.random.split(key, 4)
        # PyTorch stores weight_ih_l0 as [3H, E]; we keep the transposed [E, 3H]
        # layout so the kernel does x @ W directly.  Gate order (r, z, n).
        # Weights in bf16 (MXU inputs, halves VMEM/HBM traffic); biases and all
        # gate math stay f32.  NOTE: for best TPU layout pick H as a multiple
        # of 128 in real configs (gate slices then stay vreg-tile aligned).
        self.w_ih = jax.random.uniform(k1, (emb_dim, 3 * hid_dim),
                                       jnp.float32, -k, k).astype(jnp.bfloat16)
        self.w_hh = jax.random.uniform(k2, (hid_dim, 3 * hid_dim),
                                       jnp.float32, -k, k).astype(jnp.bfloat16)
        self.b_ih = jax.random.uniform(k3, (1, 3 * hid_dim), jnp.float32, -k, k)
        self.b_hh = jax.random.uniform(k4, (1, 3 * hid_dim), jnp.float32, -k, k)

    def __call__(self, src):
        # TODO(synk): reference forward body is `pass`; dropout applied as
        # eval-mode identity (no RNG mask), i.e. module.eval() semantics.
        outputs, hidden = gru_encoder_pallas(
            src, self.w_ih, self.w_hh, self.b_ih, self.b_hh)
        return outputs, hidden[None]   # hidden: [num_layers * dirs = 1, B, H]


def _gru_reference(src, w_ih, w_hh, b_ih, b_hh):
    """Pure-JAX reference (lax.scan) mirroring the kernel's dtype choices."""
    S, B, E = src.shape
    H = w_hh.shape[0]
    gi_all = jnp.dot(src.reshape(S * B, E).astype(w_ih.dtype), w_ih,
                     preferred_element_type=jnp.float32)
    gi_all = (gi_all + b_ih.astype(jnp.float32)).reshape(S, B, 3 * H)
    b_hh32 = b_hh.astype(jnp.float32)

    def step(h, gi):
        gh = jnp.dot(h.astype(w_hh.dtype), w_hh,
                     preferred_element_type=jnp.float32) + b_hh32
        r = jax.nn.sigmoid(gi[:, :H] + gh[:, :H])
        z = jax.nn.sigmoid(gi[:, H:2 * H] + gh[:, H:2 * H])
        n = jnp.tanh(gi[:, 2 * H:] + r * gh[:, 2 * H:])
        h_new = (1.0 - z) * n + z * h
        return h_new, h_new

    h0 = jnp.zeros((B, H), jnp.float32)
    h_last, outs = jax.lax.scan(step, h0, gi_all)
    return outs, h_last


if __name__ == "__main__":
    key = jax.random.PRNGKey(0)
    k_src, k_params = jax.random.split(key)

    seq_len, batch, emb_dim, hid_dim = 8, 2, 16, 32
    src = jax.random.normal(k_src, (seq_len, batch, emb_dim), jnp.float32)

    enc = Encoder(emb_dim, hid_dim, dropout=0.5, key=k_params)
    outputs, hidden = enc(src)
    jax.block_until_ready((outputs, hidden))

    # sanity check against pure-JAX GRU (same bf16 matmul / f32 gate math)
    ref_out, ref_h = _gru_reference(src, enc.w_ih, enc.w_hh, enc.b_ih, enc.b_hh)
    np.testing.assert_allclose(np.asarray(outputs), np.asarray(ref_out),
                               rtol=2e-2, atol=2e-2)
    np.testing.assert_allclose(np.asarray(hidden[0]), np.asarray(ref_h),
                               rtol=2e-2, atol=2e-2)

    assert outputs.shape == (seq_len, batch, hid_dim)
    assert hidden.shape == (1, batch, hid_dim)
    print("KERNEL_OK")
</pallas_src>

<mosaic_0001>
module attributes {stable_mosaic.version = 11 : i64} {
  func.func @_gru_chunk_kernel(%arg0: i32, %arg1: i32, %arg2: memref<8x8x96xf32, #tpu.memory_space<vmem>>, %arg3: memref<32x96xbf16, #tpu.memory_space<vmem>>, %arg4: memref<1x96xf32, #tpu.memory_space<vmem>>, %arg5: memref<8x8x32xf32, #tpu.memory_space<vmem>>, %arg6: memref<8x32xf32, #tpu.memory_space<vmem>>) attributes {dimension_semantics = [#tpu.dimension_semantics<parallel>, #tpu.dimension_semantics<arbitrary>], iteration_bounds = array<i64: 1, 1>, scalar_prefetch = 0 : i64, scratch_operands = 1 : i64, tpu.core_type = #tpu.core_type<tc>, window_params = [{transform_indices = @transform_0, window_bounds = array<i64: 8, 8, 96>}, {pipeline_mode = #tpu.pipeline_mode<synchronous>, transform_indices = @transform_1, window_bounds = array<i64: 32, 96>}, {pipeline_mode = #tpu.pipeline_mode<synchronous>, transform_indices = @transform_2, window_bounds = array<i64: 1, 96>}, {transform_indices = @transform_3, window_bounds = array<i64: 8, 8, 32>}]} {
    %c0_i32 = arith.constant 0 : i32
    %0 = arith.cmpi eq, %arg1, %c0_i32 : i32
    %1 = arith.extui %0 : i1 to i32
    %c0_i32_0 = arith.constant 0 : i32
    %2 = arith.cmpi ne, %1, %c0_i32_0 : i32
    scf.if %2 {
      %cst_72 = arith.constant 0.000000e+00 : f32
      %297 = vector.broadcast %cst_72 : f32 to vector<8x32xf32>
      %c0_73 = arith.constant 0 : index
      %c0_74 = arith.constant 0 : index
      %298 = vector.load %arg6[%c0_73, %c0_74] : memref<8x32xf32, #tpu.memory_space<vmem>>, vector<8x32xf32>
      tpu.vector_store %arg6[%c0_73, %c0_74], %297 {strides = array<i32>} : memref<8x32xf32, #tpu.memory_space<vmem>>, vector<8x32xf32>,
    } else {
    }
    %c0 = arith.constant 0 : index
    %c0_1 = arith.constant 0 : index
    %3 = vector.load %arg3[%c0, %c0_1] : memref<32x96xbf16, #tpu.memory_space<vmem>>, vector<32x96xbf16>
    %c0_2 = arith.constant 0 : index
    %c0_3 = arith.constant 0 : index
    %4 = vector.load %arg4[%c0_2, %c0_3] : memref<1x96xf32, #tpu.memory_space<vmem>>, vector<1x96xf32>
    %5 = vector.shape_cast %4 : vector<1x96xf32> to vector<1x96xf32>
    %6 = vector.broadcast %5 : vector<1x96xf32> to vector<8x96xf32>
    %c0_4 = arith.constant 0 : index
    %c0_5 = arith.constant 0 : index
    %7 = vector.load %arg6[%c0_4, %c0_5] : memref<8x32xf32, #tpu.memory_space<vmem>>, vector<8x32xf32>
    %c0_i32_6 = arith.constant 0 : i32
    %8 = arith.index_cast %c0_i32_6 : i32 to index
    %c0_7 = arith.constant 0 : index
    %c0_8 = arith.constant 0 : index
    %9 = vector.load %arg2[%8, %c0_7, %c0_8] : memref<8x8x96xf32, #tpu.memory_space<vmem>>, vector<1x8x96xf32>
    %10 = vector.shape_cast %9 : vector<1x8x96xf32> to vector<8x96xf32>
    %11 = arith.truncf %7 : vector<8x32xf32> to vector<8x32xbf16>
    %cst = arith.constant dense<0.000000e+00> : vector<8x96xf32>
    %12 = tpu.matmul %11, %3, %cst {dimension_numbers = #tpu.dot_dimension_numbers<[1], [0], [0], [1], [0, 0, 1, 1], [], []>} : vector<8x32xbf16>, vector<32x96xbf16>, vector<8x96xf32> -> vector<8x96xf32>
    %13 = arith.addf %12, %6 : vector<8x96xf32>
    %14 = vector.extract_strided_slice %10 {offsets = [0, 0], sizes = [8, 32], strides = [1, 1]} : vector<8x96xf32> to vector<8x32xf32>
    %15 = vector.extract_strided_slice %13 {offsets = [0, 0], sizes = [8, 32], strides = [1, 1]} : vector<8x96xf32> to vector<8x32xf32>
    %16 = arith.addf %14, %15 : vector<8x32xf32>
    %17 = arith.negf %16 : vector<8x32xf32>
    %18 = math.exp %17 : vector<8x32xf32>
    %cst_9 = arith.constant 1.000000e+00 : f32
    %19 = vector.broadcast %cst_9 : f32 to vector<8x32xf32>
    %20 = arith.addf %19, %18 : vector<8x32xf32>
    %21 = arith.divf %19, %20 : vector<8x32xf32>
    %22 = vector.extract_strided_slice %10 {offsets = [0, 32], sizes = [8, 32], strides = [1, 1]} : vector<8x96xf32> to vector<8x32xf32>
    %23 = vector.extract_strided_slice %13 {offsets = [0, 32], sizes = [8, 32], strides = [1, 1]} : vector<8x96xf32> to vector<8x32xf32>
    %24 = arith.addf %22, %23 : vector<8x32xf32>
    %25 = arith.negf %24 : vector<8x32xf32>
    %26 = math.exp %25 : vector<8x32xf32>
    %cst_10 = arith.constant 1.000000e+00 : f32
    %27 = vector.broadcast %cst_10 : f32 to vector<8x32xf32>
    %28 = arith.addf %27, %26 : vector<8x32xf32>
    %29 = arith.divf %27, %28 : vector<8x32xf32>
    %30 = vector.extract_strided_slice %10 {offsets = [0, 64], sizes = [8, 32], strides = [1, 1]} : vector<8x96xf32> to vector<8x32xf32>
    %31 = vector.extract_strided_slice %13 {offsets = [0, 64], sizes = [8, 32], strides = [1, 1]} : vector<8x96xf32> to vector<8x32xf32>
    %32 = arith.mulf %21, %31 : vector<8x32xf32>
    %33 = arith.addf %30, %32 : vector<8x32xf32>
    %34 = math.tanh %33 : vector<8x32xf32>
    %cst_11 = arith.constant 1.000000e+00 : f32
    %35 = vector.broadcast %cst_11 : f32 to vector<8x32xf32>
    %36 = arith.subf %35, %29 : vector<8x32xf32>
    %37 = arith.mulf %36, %34 : vector<8x32xf32>
    %38 = arith.mulf %29, %7 : vector<8x32xf32>
    %39 = arith.addf %37, %38 : vector<8x32xf32>
    %40 = arith.index_cast %c0_i32_6 : i32 to index
    %c0_12 = arith.constant 0 : index
    %c0_13 = arith.constant 0 : index
    %41 = vector.load %arg5[%40, %c0_12, %c0_13] : memref<8x8x32xf32, #tpu.memory_space<vmem>>, vector<1x8x32xf32>
    %42 = vector.shape_cast %41 : vector<1x8x32xf32> to vector<8x32xf32>
    %43 = vector.shape_cast %39 : vector<8x32xf32> to vector<1x8x32xf32>
    tpu.vector_store %arg5[%40, %c0_12, %c0_13], %43 {strides = array<i32>} : memref<8x8x32xf32, #tpu.memory_space<vmem>>, vector<1x8x32xf32>,
    %c1_i32 = arith.constant 1 : i32
    %44 = arith.index_cast %c1_i32 : i32 to index
    %c0_14 = arith.constant 0 : index
    %c0_15 = arith.constant 0 : index
    %45 = vector.load %arg2[%44, %c0_14, %c0_15] : memref<8x8x96xf32, #tpu.memory_space<vmem>>, vector<1x8x96xf32>
    %46 = vector.shape_cast %45 : vector<1x8x96xf32> to vector<8x96xf32>
    %47 = arith.truncf %39 : vector<8x32xf32> to vector<8x32xbf16>
    %cst_16 = arith.constant dense<0.000000e+00> : vector<8x96xf32>
    %48 = tpu.matmul %47, %3, %cst_16 {dimension_numbers = #tpu.dot_dimension_numbers<[1], [0], [0], [1], [0, 0, 1, 1], [], []>} : vector<8x32xbf16>, vector<32x96xbf16>, vector<8x96xf32> -> vector<8x96xf32>
    %49 = arith.addf %48, %6 : vector<8x96xf32>
    %50 = vector.extract_strided_slice %46 {offsets = [0, 0], sizes = [8, 32], strides = [1, 1]} : vector<8x96xf32> to vector<8x32xf32>
    %51 = vector.extract_strided_slice %49 {offsets = [0, 0], sizes = [8, 32], strides = [1, 1]} : vector<8x96xf32> to vector<8x32xf32>
    %52 = arith.addf %50, %51 : vector<8x32xf32>
    %53 = arith.negf %52 : vector<8x32xf32>
    %54 = math.exp %53 : vector<8x32xf32>
    %cst_17 = arith.constant 1.000000e+00 : f32
    %55 = vector.broadcast %cst_17 : f32 to vector<8x32xf32>
    %56 = arith.addf %55, %54 : vector<8x32xf32>
    %57 = arith.divf %55, %56 : vector<8x32xf32>
    %58 = vector.extract_strided_slice %46 {offsets = [0, 32], sizes = [8, 32], strides = [1, 1]} : vector<8x96xf32> to vector<8x32xf32>
    %59 = vector.extract_strided_slice %49 {offsets = [0, 32], sizes = [8, 32], strides = [1, 1]} : vector<8x96xf32> to vector<8x32xf32>
    %60 = arith.addf %58, %59 : vector<8x32xf32>
    %61 = arith.negf %60 : vector<8x32xf32>
    %62 = math.exp %61 : vector<8x32xf32>
    %cst_18 = arith.constant 1.000000e+00 : f32
    %63 = vector.broadcast %cst_18 : f32 to vector<8x32xf32>
    %64 = arith.addf %63, %62 : vector<8x32xf32>
    %65 = arith.divf %63, %64 : vector<8x32xf32>
    %66 = vector.extract_strided_slice %46 {offsets = [0, 64], sizes = [8, 32], strides = [1, 1]} : vector<8x96xf32> to vector<8x32xf32>
    %67 = vector.extract_strided_slice %49 {offsets = [0, 64], sizes = [8, 32], strides = [1, 1]} : vector<8x96xf32> to vector<8x32xf32>
    %68 = arith.mulf %57, %67 : vector<8x32xf32>
    %69 = arith.addf %66, %68 : vector<8x32xf32>
    %70 = math.tanh %69 : vector<8x32xf32>
    %cst_19 = arith.constant 1.000000e+00 : f32
    %71 = vector.broadcast %cst_19 : f32 to vector<8x32xf32>
    %72 = arith.subf %71, %65 : vector<8x32xf32>
    %73 = arith.mulf %72, %70 : vector<8x32xf32>
    %74 = arith.mulf %65, %39 : vector<8x32xf32>
    %75 = arith.addf %73, %74 : vector<8x32xf32>
    %76 = arith.index_cast %c1_i32 : i32 to index
    %c0_20 = arith.constant 0 : index
    %c0_21 = arith.constant 0 : index
    %77 = vector.load %arg5[%76, %c0_20, %c0_21] : memref<8x8x32xf32, #tpu.memory_space<vmem>>, vector<1x8x32xf32>
    %78 = vector.shape_cast %77 : vector<1x8x32xf32> to vector<8x32xf32>
    %79 = vector.shape_cast %75 : vector<8x32xf32> to vector<1x8x32xf32>
    tpu.vector_store %arg5[%76, %c0_20, %c0_21], %79 {strides = array<i32>} : memref<8x8x32xf32, #tpu.memory_space<vmem>>, vector<1x8x32xf32>,
    %c2_i32 = arith.constant 2 : i32
    %80 = arith.index_cast %c2_i32 : i32 to index
    %c0_22 = arith.constant 0 : index
    %c0_23 = arith.constant 0 : index
    %81 = vector.load %arg2[%80, %c0_22, %c0_23] : memref<8x8x96xf32, #tpu.memory_space<vmem>>, vector<1x8x96xf32>
    %82 = vector.shape_cast %81 : vector<1x8x96xf32> to vector<8x96xf32>
    %83 = arith.truncf %75 : vector<8x32xf32> to vector<8x32xbf16>
    %cst_24 = arith.constant dense<0.000000e+00> : vector<8x96xf32>
    %84 = tpu.matmul %83, %3, %cst_24 {dimension_numbers = #tpu.dot_dimension_numbers<[1], [0], [0], [1], [0, 0, 1, 1], [], []>} : vector<8x32xbf16>, vector<32x96xbf16>, vector<8x96xf32> -> vector<8x96xf32>
    %85 = arith.addf %84, %6 : vector<8x96xf32>
    %86 = vector.extract_strided_slice %82 {offsets = [0, 0], sizes = [8, 32], strides = [1, 1]} : vector<8x96xf32> to vector<8x32xf32>
    %87 = vector.extract_strided_slice %85 {offsets = [0, 0], sizes = [8, 32], strides = [1, 1]} : vector<8x96xf32> to vector<8x32xf32>
    %88 = arith.addf %86, %87 : vector<8x32xf32>
    %89 = arith.negf %88 : vector<8x32xf32>
    %90 = math.exp %89 : vector<8x32xf32>
    %cst_25 = arith.constant 1.000000e+00 : f32
    %91 = vector.broadcast %cst_25 : f32 to vector<8x32xf32>
    %92 = arith.addf %91, %90 : vector<8x32xf32>
    %93 = arith.divf %91, %92 : vector<8x32xf32>
    %94 = vector.extract_strided_slice %82 {offsets = [0, 32], sizes = [8, 32], strides = [1, 1]} : vector<8x96xf32> to vector<8x32xf32>
    %95 = vector.extract_strided_slice %85 {offsets = [0, 32], sizes = [8, 32], strides = [1, 1]} : vector<8x96xf32> to vector<8x32xf32>
    %96 = arith.addf %94, %95 : vector<8x32xf32>
    %97 = arith.negf %96 : vector<8x32xf32>
    %98 = math.exp %97 : vector<8x32xf32>
    %cst_26 = arith.constant 1.000000e+00 : f32
    %99 = vector.broadcast %cst_26 : f32 to vector<8x32xf32>
    %100 = arith.addf %99, %98 : vector<8x32xf32>
    %101 = arith.divf %99, %100 : vector<8x32xf32>
    %102 = vector.extract_strided_slice %82 {offsets = [0, 64], sizes = [8, 32], strides = [1, 1]} : vector<8x96xf32> to vector<8x32xf32>
    %103 = vector.extract_strided_slice %85 {offsets = [0, 64], sizes = [8, 32], strides = [1, 1]} : vector<8x96xf32> to vector<8x32xf32>
    %104 = arith.mulf %93, %103 : vector<8x32xf32>
    %105 = arith.addf %102, %104 : vector<8x32xf32>
    %106 = math.tanh %105 : vector<8x32xf32>
    %cst_27 = arith.constant 1.000000e+00 : f32
    %107 = vector.broadcast %cst_27 : f32 to vector<8x32xf32>
    %108 = arith.subf %107, %101 : vector<8x32xf32>
    %109 = arith.mulf %108, %106 : vector<8x32xf32>
    %110 = arith.mulf %101, %75 : vector<8x32xf32>
    %111 = arith.addf %109, %110 : vector<8x32xf32>
    %112 = arith.index_cast %c2_i32 : i32 to index
    %c0_28 = arith.constant 0 : index
    %c0_29 = arith.constant 0 : index
    %113 = vector.load %arg5[%112, %c0_28, %c0_29] : memref<8x8x32xf32, #tpu.memory_space<vmem>>, vector<1x8x32xf32>
    %114 = vector.shape_cast %113 : vector<1x8x32xf32> to vector<8x32xf32>
    %115 = vector.shape_cast %111 : vector<8x32xf32> to vector<1x8x32xf32>
    tpu.vector_store %arg5[%112, %c0_28, %c0_29], %115 {strides = array<i32>} : memref<8x8x32xf32, #tpu.memory_space<vmem>>, vector<1x8x32xf32>,
    %c3_i32 = arith.constant 3 : i32
    %116 = arith.index_cast %c3_i32 : i32 to index
    %c0_30 = arith.constant 0 : index
    %c0_31 = arith.constant 0 : index
    %117 = vector.load %arg2[%116, %c0_30, %c0_31] : memref<8x8x96xf32, #tpu.memory_space<vmem>>, vector<1x8x96xf32>
    %118 = vector.shape_cast %117 : vector<1x8x96xf32> to vector<8x96xf32>
    %119 = arith.truncf %111 : vector<8x32xf32> to vector<8x32xbf16>
    %cst_32 = arith.constant dense<0.000000e+00> : vector<8x96xf32>
    %120 = tpu.matmul %119, %3, %cst_32 {dimension_numbers = #tpu.dot_dimension_numbers<[1], [0], [0], [1], [0, 0, 1, 1], [], []>} : vector<8x32xbf16>, vector<32x96xbf16>, vector<8x96xf32> -> vector<8x96xf32>
    %121 = arith.addf %120, %6 : vector<8x96xf32>
    %122 = vector.extract_strided_slice %118 {offsets = [0, 0], sizes = [8, 32], strides = [1, 1]} : vector<8x96xf32> to vector<8x32xf32>
    %123 = vector.extract_strided_slice %121 {offsets = [0, 0], sizes = [8, 32], strides = [1, 1]} : vector<8x96xf32> to vector<8x32xf32>
    %124 = arith.addf %122, %123 : vector<8x32xf32>
    %125 = arith.negf %124 : vector<8x32xf32>
    %126 = math.exp %125 : vector<8x32xf32>
    %cst_33 = arith.constant 1.000000e+00 : f32
    %127 = vector.broadcast %cst_33 : f32 to vector<8x32xf32>
    %128 = arith.addf %127, %126 : vector<8x32xf32>
    %129 = arith.divf %127, %128 : vector<8x32xf32>
    %130 = vector.extract_strided_slice %118 {offsets = [0, 32], sizes = [8, 32], strides = [1, 1]} : vector<8x96xf32> to vector<8x32xf32>
    %131 = vector.extract_strided_slice %121 {offsets = [0, 32], sizes = [8, 32], strides = [1, 1]} : vector<8x96xf32> to vector<8x32xf32>
    %132 = arith.addf %130, %131 : vector<8x32xf32>
    %133 = arith.negf %132 : vector<8x32xf32>
    %134 = math.exp %133 : vector<8x32xf32>
    %cst_34 = arith.constant 1.000000e+00 : f32
    %135 = vector.broadcast %cst_34 : f32 to vector<8x32xf32>
    %136 = arith.addf %135, %134 : vector<8x32xf32>
    %137 = arith.divf %135, %136 : vector<8x32xf32>
    %138 = vector.extract_strided_slice %118 {offsets = [0, 64], sizes = [8, 32], strides = [1, 1]} : vector<8x96xf32> to vector<8x32xf32>
    %139 = vector.extract_strided_slice %121 {offsets = [0, 64], sizes = [8, 32], strides = [1, 1]} : vector<8x96xf32> to vector<8x32xf32>
    %140 = arith.mulf %129, %139 : vector<8x32xf32>
    %141 = arith.addf %138, %140 : vector<8x32xf32>
    %142 = math.tanh %141 : vector<8x32xf32>
    %cst_35 = arith.constant 1.000000e+00 : f32
    %143 = vector.broadcast %cst_35 : f32 to vector<8x32xf32>
    %144 = arith.subf %143, %137 : vector<8x32xf32>
    %145 = arith.mulf %144, %142 : vector<8x32xf32>
    %146 = arith.mulf %137, %111 : vector<8x32xf32>
    %147 = arith.addf %145, %146 : vector<8x32xf32>
    %148 = arith.index_cast %c3_i32 : i32 to index
    %c0_36 = arith.constant 0 : index
    %c0_37 = arith.constant 0 : index
    %149 = vector.load %arg5[%148, %c0_36, %c0_37] : memref<8x8x32xf32, #tpu.memory_space<vmem>>, vector<1x8x32xf32>
    %150 = vector.shape_cast %149 : vector<1x8x32xf32> to vector<8x32xf32>
    %151 = vector.shape_cast %147 : vector<8x32xf32> to vector<1x8x32xf32>
    tpu.vector_store %arg5[%148, %c0_36, %c0_37], %151 {strides = array<i32>} : memref<8x8x32xf32, #tpu.memory_space<vmem>>, vector<1x8x32xf32>,
    %c4_i32 = arith.constant 4 : i32
    %152 = arith.index_cast %c4_i32 : i32 to index
    %c0_38 = arith.constant 0 : index
    %c0_39 = arith.constant 0 : index
    %153 = vector.load %arg2[%152, %c0_38, %c0_39] : memref<8x8x96xf32, #tpu.memory_space<vmem>>, vector<1x8x96xf32>
    %154 = vector.shape_cast %153 : vector<1x8x96xf32> to vector<8x96xf32>
    %155 = arith.truncf %147 : vector<8x32xf32> to vector<8x32xbf16>
    %cst_40 = arith.constant dense<0.000000e+00> : vector<8x96xf32>
    %156 = tpu.matmul %155, %3, %cst_40 {dimension_numbers = #tpu.dot_dimension_numbers<[1], [0], [0], [1], [0, 0, 1, 1], [], []>} : vector<8x32xbf16>, vector<32x96xbf16>, vector<8x96xf32> -> vector<8x96xf32>
    %157 = arith.addf %156, %6 : vector<8x96xf32>
    %158 = vector.extract_strided_slice %154 {offsets = [0, 0], sizes = [8, 32], strides = [1, 1]} : vector<8x96xf32> to vector<8x32xf32>
    %159 = vector.extract_strided_slice %157 {offsets = [0, 0], sizes = [8, 32], strides = [1, 1]} : vector<8x96xf32> to vector<8x32xf32>
    %160 = arith.addf %158, %159 : vector<8x32xf32>
    %161 = arith.negf %160 : vector<8x32xf32>
    %162 = math.exp %161 : vector<8x32xf32>
    %cst_41 = arith.constant 1.000000e+00 : f32
    %163 = vector.broadcast %cst_41 : f32 to vector<8x32xf32>
    %164 = arith.addf %163, %162 : vector<8x32xf32>
    %165 = arith.divf %163, %164 : vector<8x32xf32>
    %166 = vector.extract_strided_slice %154 {offsets = [0, 32], sizes = [8, 32], strides = [1, 1]} : vector<8x96xf32> to vector<8x32xf32>
    %167 = vector.extract_strided_slice %157 {offsets = [0, 32], sizes = [8, 32], strides = [1, 1]} : vector<8x96xf32> to vector<8x32xf32>
    %168 = arith.addf %166, %167 : vector<8x32xf32>
    %169 = arith.negf %168 : vector<8x32xf32>
    %170 = math.exp %169 : vector<8x32xf32>
    %cst_42 = arith.constant 1.000000e+00 : f32
    %171 = vector.broadcast %cst_42 : f32 to vector<8x32xf32>
    %172 = arith.addf %171, %170 : vector<8x32xf32>
    %173 = arith.divf %171, %172 : vector<8x32xf32>
    %174 = vector.extract_strided_slice %154 {offsets = [0, 64], sizes = [8, 32], strides = [1, 1]} : vector<8x96xf32> to vector<8x32xf32>
    %175 = vector.extract_strided_slice %157 {offsets = [0, 64], sizes = [8, 32], strides = [1, 1]} : vector<8x96xf32> to vector<8x32xf32>
    %176 = arith.mulf %165, %175 : vector<8x32xf32>
    %177 = arith.addf %174, %176 : vector<8x32xf32>
    %178 = math.tanh %177 : vector<8x32xf32>
    %cst_43 = arith.constant 1.000000e+00 : f32
    %179 = vector.broadcast %cst_43 : f32 to vector<8x32xf32>
    %180 = arith.subf %179, %173 : vector<8x32xf32>
    %181 = arith.mulf %180, %178 : vector<8x32xf32>
    %182 = arith.mulf %173, %147 : vector<8x32xf32>
    %183 = arith.addf %181, %182 : vector<8x32xf32>
    %184 = arith.index_cast %c4_i32 : i32 to index
    %c0_44 = arith.constant 0 : index
    %c0_45 = arith.constant 0 : index
    %185 = vector.load %arg5[%184, %c0_44, %c0_45] : memref<8x8x32xf32, #tpu.memory_space<vmem>>, vector<1x8x32xf32>
    %186 = vector.shape_cast %185 : vector<1x8x32xf32> to vector<8x32xf32>
    %187 = vector.shape_cast %183 : vector<8x32xf32> to vector<1x8x32xf32>
    tpu.vector_store %arg5[%184, %c0_44, %c0_45], %187 {strides = array<i32>} : memref<8x8x32xf32, #tpu.memory_space<vmem>>, vector<1x8x32xf32>,
    %c5_i32 = arith.constant 5 : i32
    %188 = arith.index_cast %c5_i32 : i32 to index
    %c0_46 = arith.constant 0 : index
    %c0_47 = arith.constant 0 : index
    %189 = vector.load %arg2[%188, %c0_46, %c0_47] : memref<8x8x96xf32, #tpu.memory_space<vmem>>, vector<1x8x96xf32>
    %190 = vector.shape_cast %189 : vector<1x8x96xf32> to vector<8x96xf32>
    %191 = arith.truncf %183 : vector<8x32xf32> to vector<8x32xbf16>
    %cst_48 = arith.constant dense<0.000000e+00> : vector<8x96xf32>
    %192 = tpu.matmul %191, %3, %cst_48 {dimension_numbers = #tpu.dot_dimension_numbers<[1], [0], [0], [1], [0, 0, 1, 1], [], []>} : vector<8x32xbf16>, vector<32x96xbf16>, vector<8x96xf32> -> vector<8x96xf32>
    %193 = arith.addf %192, %6 : vector<8x96xf32>
    %194 = vector.extract_strided_slice %190 {offsets = [0, 0], sizes = [8, 32], strides = [1, 1]} : vector<8x96xf32> to vector<8x32xf32>
    %195 = vector.extract_strided_slice %193 {offsets = [0, 0], sizes = [8, 32], strides = [1, 1]} : vector<8x96xf32> to vector<8x32xf32>
    %196 = arith.addf %194, %195 : vector<8x32xf32>
    %197 = arith.negf %196 : vector<8x32xf32>
    %198 = math.exp %197 : vector<8x32xf32>
    %cst_49 = arith.constant 1.000000e+00 : f32
    %199 = vector.broadcast %cst_49 : f32 to vector<8x32xf32>
    %200 = arith.addf %199, %198 : vector<8x32xf32>
    %201 = arith.divf %199, %200 : vector<8x32xf32>
    %202 = vector.extract_strided_slice %190 {offsets = [0, 32], sizes = [8, 32], strides = [1, 1]} : vector<8x96xf32> to vector<8x32xf32>
    %203 = vector.extract_strided_slice %193 {offsets = [0, 32], sizes = [8, 32], strides = [1, 1]} : vector<8x96xf32> to vector<8x32xf32>
    %204 = arith.addf %202, %203 : vector<8x32xf32>
    %205 = arith.negf %204 : vector<8x32xf32>
    %206 = math.exp %205 : vector<8x32xf32>
    %cst_50 = arith.constant 1.000000e+00 : f32
    %207 = vector.broadcast %cst_50 : f32 to vector<8x32xf32>
    %208 = arith.addf %207, %206 : vector<8x32xf32>
    %209 = arith.divf %207, %208 : vector<8x32xf32>
    %210 = vector.extract_strided_slice %190 {offsets = [0, 64], sizes = [8, 32], strides = [1, 1]} : vector<8x96xf32> to vector<8x32xf32>
    %211 = vector.extract_strided_slice %193 {offsets = [0, 64], sizes = [8, 32], strides = [1, 1]} : vector<8x96xf32> to vector<8x32xf32>
    %212 = arith.mulf %201, %211 : vector<8x32xf32>
    %213 = arith.addf %210, %212 : vector<8x32xf32>
    %214 = math.tanh %213 : vector<8x32xf32>
    %cst_51 = arith.constant 1.000000e+00 : f32
    %215 = vector.broadcast %cst_51 : f32 to vector<8x32xf32>
    %216 = arith.subf %215, %209 : vector<8x32xf32>
    %217 = arith.mulf %216, %214 : vector<8x32xf32>
    %218 = arith.mulf %209, %183 : vector<8x32xf32>
    %219 = arith.addf %217, %218 : vector<8x32xf32>
    %220 = arith.index_cast %c5_i32 : i32 to index
    %c0_52 = arith.constant 0 : index
    %c0_53 = arith.constant 0 : index
    %221 = vector.load %arg5[%220, %c0_52, %c0_53] : memref<8x8x32xf32, #tpu.memory_space<vmem>>, vector<1x8x32xf32>
    %222 = vector.shape_cast %221 : vector<1x8x32xf32> to vector<8x32xf32>
    %223 = vector.shape_cast %219 : vector<8x32xf32> to vector<1x8x32xf32>
    tpu.vector_store %arg5[%220, %c0_52, %c0_53], %223 {strides = array<i32>} : memref<8x8x32xf32, #tpu.memory_space<vmem>>, vector<1x8x32xf32>,
    %c6_i32 = arith.constant 6 : i32
    %224 = arith.index_cast %c6_i32 : i32 to index
    %c0_54 = arith.constant 0 : index
    %c0_55 = arith.constant 0 : index
    %225 = vector.load %arg2[%224, %c0_54, %c0_55] : memref<8x8x96xf32, #tpu.memory_space<vmem>>, vector<1x8x96xf32>
    %226 = vector.shape_cast %225 : vector<1x8x96xf32> to vector<8x96xf32>
    %227 = arith.truncf %219 : vector<8x32xf32> to vector<8x32xbf16>
    %cst_56 = arith.constant dense<0.000000e+00> : vector<8x96xf32>
    %228 = tpu.matmul %227, %3, %cst_56 {dimension_numbers = #tpu.dot_dimension_numbers<[1], [0], [0], [1], [0, 0, 1, 1], [], []>} : vector<8x32xbf16>, vector<32x96xbf16>, vector<8x96xf32> -> vector<8x96xf32>
    %229 = arith.addf %228, %6 : vector<8x96xf32>
    %230 = vector.extract_strided_slice %226 {offsets = [0, 0], sizes = [8, 32], strides = [1, 1]} : vector<8x96xf32> to vector<8x32xf32>
    %231 = vector.extract_strided_slice %229 {offsets = [0, 0], sizes = [8, 32], strides = [1, 1]} : vector<8x96xf32> to vector<8x32xf32>
    %232 = arith.addf %230, %231 : vector<8x32xf32>
    %233 = arith.negf %232 : vector<8x32xf32>
    %234 = math.exp %233 : vector<8x32xf32>
    %cst_57 = arith.constant 1.000000e+00 : f32
    %235 = vector.broadcast %cst_57 : f32 to vector<8x32xf32>
    %236 = arith.addf %235, %234 : vector<8x32xf32>
    %237 = arith.divf %235, %236 : vector<8x32xf32>
    %238 = vector.extract_strided_slice %226 {offsets = [0, 32], sizes = [8, 32], strides = [1, 1]} : vector<8x96xf32> to vector<8x32xf32>
    %239 = vector.extract_strided_slice %229 {offsets = [0, 32], sizes = [8, 32], strides = [1, 1]} : vector<8x96xf32> to vector<8x32xf32>
    %240 = arith.addf %238, %239 : vector<8x32xf32>
    %241 = arith.negf %240 : vector<8x32xf32>
    %242 = math.exp %241 : vector<8x32xf32>
    %cst_58 = arith.constant 1.000000e+00 : f32
    %243 = vector.broadcast %cst_58 : f32 to vector<8x32xf32>
    %244 = arith.addf %243, %242 : vector<8x32xf32>
    %245 = arith.divf %243, %244 : vector<8x32xf32>
    %246 = vector.extract_strided_slice %226 {offsets = [0, 64], sizes = [8, 32], strides = [1, 1]} : vector<8x96xf32> to vector<8x32xf32>
    %247 = vector.extract_strided_slice %229 {offsets = [0, 64], sizes = [8, 32], strides = [1, 1]} : vector<8x96xf32> to vector<8x32xf32>
    %248 = arith.mulf %237, %247 : vector<8x32xf32>
    %249 = arith.addf %246, %248 : vector<8x32xf32>
    %250 = math.tanh %249 : vector<8x32xf32>
    %cst_59 = arith.constant 1.000000e+00 : f32
    %251 = vector.broadcast %cst_59 : f32 to vector<8x32xf32>
    %252 = arith.subf %251, %245 : vector<8x32xf32>
    %253 = arith.mulf %252, %250 : vector<8x32xf32>
    %254 = arith.mulf %245, %219 : vector<8x32xf32>
    %255 = arith.addf %253, %254 : vector<8x32xf32>
    %256 = arith.index_cast %c6_i32 : i32 to index
    %c0_60 = arith.constant 0 : index
    %c0_61 = arith.constant 0 : index
    %257 = vector.load %arg5[%256, %c0_60, %c0_61] : memref<8x8x32xf32, #tpu.memory_space<vmem>>, vector<1x8x32xf32>
    %258 = vector.shape_cast %257 : vector<1x8x32xf32> to vector<8x32xf32>
    %259 = vector.shape_cast %255 : vector<8x32xf32> to vector<1x8x32xf32>
    tpu.vector_store %arg5[%256, %c0_60, %c0_61], %259 {strides = array<i32>} : memref<8x8x32xf32, #tpu.memory_space<vmem>>, vector<1x8x32xf32>,
    %c7_i32 = arith.constant 7 : i32
    %260 = arith.index_cast %c7_i32 : i32 to index
    %c0_62 = arith.constant 0 : index
    %c0_63 = arith.constant 0 : index
    %261 = vector.load %arg2[%260, %c0_62, %c0_63] : memref<8x8x96xf32, #tpu.memory_space<vmem>>, vector<1x8x96xf32>
    %262 = vector.shape_cast %261 : vector<1x8x96xf32> to vector<8x96xf32>
    %263 = arith.truncf %255 : vector<8x32xf32> to vector<8x32xbf16>
    %cst_64 = arith.constant dense<0.000000e+00> : vector<8x96xf32>
    %264 = tpu.matmul %263, %3, %cst_64 {dimension_numbers = #tpu.dot_dimension_numbers<[1], [0], [0], [1], [0, 0, 1, 1], [], []>} : vector<8x32xbf16>, vector<32x96xbf16>, vector<8x96xf32> -> vector<8x96xf32>
    %265 = arith.addf %264, %6 : vector<8x96xf32>
    %266 = vector.extract_strided_slice %262 {offsets = [0, 0], sizes = [8, 32], strides = [1, 1]} : vector<8x96xf32> to vector<8x32xf32>
    %267 = vector.extract_strided_slice %265 {offsets = [0, 0], sizes = [8, 32], strides = [1, 1]} : vector<8x96xf32> to vector<8x32xf32>
    %268 = arith.addf %266, %267 : vector<8x32xf32>
    %269 = arith.negf %268 : vector<8x32xf32>
    %270 = math.exp %269 : vector<8x32xf32>
    %cst_65 = arith.constant 1.000000e+00 : f32
    %271 = vector.broadcast %cst_65 : f32 to vector<8x32xf32>
    %272 = arith.addf %271, %270 : vector<8x32xf32>
    %273 = arith.divf %271, %272 : vector<8x32xf32>
    %274 = vector.extract_strided_slice %262 {offsets = [0, 32], sizes = [8, 32], strides = [1, 1]} : vector<8x96xf32> to vector<8x32xf32>
    %275 = vector.extract_strided_slice %265 {offsets = [0, 32], sizes = [8, 32], strides = [1, 1]} : vector<8x96xf32> to vector<8x32xf32>
    %276 = arith.addf %274, %275 : vector<8x32xf32>
    %277 = arith.negf %276 : vector<8x32xf32>
    %278 = math.exp %277 : vector<8x32xf32>
    %cst_66 = arith.constant 1.000000e+00 : f32
    %279 = vector.broadcast %cst_66 : f32 to vector<8x32xf32>
    %280 = arith.addf %279, %278 : vector<8x32xf32>
    %281 = arith.divf %279, %280 : vector<8x32xf32>
    %282 = vector.extract_strided_slice %262 {offsets = [0, 64], sizes = [8, 32], strides = [1, 1]} : vector<8x96xf32> to vector<8x32xf32>
    %283 = vector.extract_strided_slice %265 {offsets = [0, 64], sizes = [8, 32], strides = [1, 1]} : vector<8x96xf32> to vector<8x32xf32>
    %284 = arith.mulf %273, %283 : vector<8x32xf32>
    %285 = arith.addf %282, %284 : vector<8x32xf32>
    %286 = math.tanh %285 : vector<8x32xf32>
    %cst_67 = arith.constant 1.000000e+00 : f32
    %287 = vector.broadcast %cst_67 : f32 to vector<8x32xf32>
    %288 = arith.subf %287, %281 : vector<8x32xf32>
    %289 = arith.mulf %288, %286 : vector<8x32xf32>
    %290 = arith.mulf %281, %255 : vector<8x32xf32>
    %291 = arith.addf %289, %290 : vector<8x32xf32>
    %292 = arith.index_cast %c7_i32 : i32 to index
    %c0_68 = arith.constant 0 : index
    %c0_69 = arith.constant 0 : index
    %293 = vector.load %arg5[%292, %c0_68, %c0_69] : memref<8x8x32xf32, #tpu.memory_space<vmem>>, vector<1x8x32xf32>
    %294 = vector.shape_cast %293 : vector<1x8x32xf32> to vector<8x32xf32>
    %295 = vector.shape_cast %291 : vector<8x32xf32> to vector<1x8x32xf32>
    tpu.vector_store %arg5[%292, %c0_68, %c0_69], %295 {strides = array<i32>} : memref<8x8x32xf32, #tpu.memory_space<vmem>>, vector<1x8x32xf32>,
    %c8_i32 = arith.constant 8 : i32
    %c0_70 = arith.constant 0 : index
    %c0_71 = arith.constant 0 : index
    %296 = vector.load %arg6[%c0_70, %c0_71] : memref<8x32xf32, #tpu.memory_space<vmem>>, vector<8x32xf32>
    tpu.vector_store %arg6[%c0_70, %c0_71], %291 {strides = array<i32>} : memref<8x32xf32, #tpu.memory_space<vmem>>, vector<8x32xf32>,
    return
  }
  func.func @transform_0(%arg0: i32, %arg1: i32) -> (i32, i32, i32) {
    %c0_i32 = arith.constant 0 : i32
    %c0_i32_0 = arith.constant 0 : i32
    return %arg1, %arg0, %c0_i32 : i32, i32, i32
  }
  func.func @transform_1(%arg0: i32, %arg1: i32) -> (i32, i32) {
    %c0_i32 = arith.constant 0 : i32
    %c0_i32_0 = arith.constant 0 : i32
    %c0_i32_1 = arith.constant 0 : i32
    return %c0_i32, %c0_i32_0 : i32, i32
  }
  func.func @transform_2(%arg0: i32, %arg1: i32) -> (i32, i32) {
    %c0_i32 = arith.constant 0 : i32
    %c0_i32_0 = arith.constant 0 : i32
    %c0_i32_1 = arith.constant 0 : i32
    return %c0_i32, %c0_i32_0 : i32, i32
  }
  func.func @transform_3(%arg0: i32, %arg1: i32) -> (i32, i32, i32) {
    %c0_i32 = arith.constant 0 : i32
    %c0_i32_0 = arith.constant 0 : i32
    return %arg1, %arg0, %c0_i32 : i32, i32, i32
  }
}

module attributes {stable_mosaic.version = 11 : i64} {
  func.func @_gru_chunk_kernel(%arg0: i32, %arg1: i32, %arg2: memref<8x8x96xf32, #tpu.memory_space<vmem>>, %arg3: memref<32x96xbf16, #tpu.memory_space<vmem>>, %arg4: memref<1x96xf32, #tpu.memory_space<vmem>>, %arg5: memref<8x8x32xf32, #tpu.memory_space<vmem>>, %arg6: memref<8x32xf32, #tpu.memory_space<vmem>>) attributes {dimension_semantics = [#tpu.dimension_semantics<parallel>, #tpu.dimension_semantics<arbitrary>], iteration_bounds = array<i64: 1, 1>, scalar_prefetch = 0 : i64, scratch_operands = 1 : i64, tpu.core_type = #tpu.core_type<tc>, window_params = [{transform_indices = @transform_0, window_bounds = array<i64: 8, 8, 96>}, {pipeline_mode = #tpu.pipeline_mode<synchronous>, transform_indices = @transform_1, window_bounds = array<i64: 32, 96>}, {pipeline_mode = #tpu.pipeline_mode<synchronous>, transform_indices = @transform_2, window_bounds = array<i64: 1, 96>}, {transform_indices = @transform_3, window_bounds = array<i64: 8, 8, 32>}]} {
    %c0_i32 = arith.constant 0 : i32
    %0 = arith.cmpi eq, %arg1, %c0_i32 : i32
    %1 = arith.extui %0 : i1 to i32
    %c0_i32_0 = arith.constant 0 : i32
    %2 = arith.cmpi ne, %1, %c0_i32_0 : i32
    scf.if %2 {
      %cst_72 = arith.constant 0.000000e+00 : f32
      %297 = vector.broadcast %cst_72 : f32 to vector<8x32xf32>
      %c0_73 = arith.constant 0 : index
      %c0_74 = arith.constant 0 : index
      %298 = vector.load %arg6[%c0_73, %c0_74] : memref<8x32xf32, #tpu.memory_space<vmem>>, vector<8x32xf32>
      tpu.vector_store %arg6[%c0_73, %c0_74], %297 {strides = array<i32>} : memref<8x32xf32, #tpu.memory_space<vmem>>, vector<8x32xf32>,
    } else {
    }
    %c0 = arith.constant 0 : index
    %c0_1 = arith.constant 0 : index
    %3 = vector.load %arg3[%c0, %c0_1] : memref<32x96xbf16, #tpu.memory_space<vmem>>, vector<32x96xbf16>
    %c0_2 = arith.constant 0 : index
    %c0_3 = arith.constant 0 : index
    %4 = vector.load %arg4[%c0_2, %c0_3] : memref<1x96xf32, #tpu.memory_space<vmem>>, vector<1x96xf32>
    %5 = vector.shape_cast %4 : vector<1x96xf32> to vector<1x96xf32>
    %6 = vector.broadcast %5 : vector<1x96xf32> to vector<8x96xf32>
    %c0_4 = arith.constant 0 : index
    %c0_5 = arith.constant 0 : index
    %7 = vector.load %arg6[%c0_4, %c0_5] : memref<8x32xf32, #tpu.memory_space<vmem>>, vector<8x32xf32>
    %c0_i32_6 = arith.constant 0 : i32
    %8 = arith.index_cast %c0_i32_6 : i32 to index
    %c0_7 = arith.constant 0 : index
    %c0_8 = arith.constant 0 : index
    %9 = vector.load %arg2[%8, %c0_7, %c0_8] : memref<8x8x96xf32, #tpu.memory_space<vmem>>, vector<1x8x96xf32>
    %10 = vector.shape_cast %9 : vector<1x8x96xf32> to vector<8x96xf32>
    %11 = arith.truncf %7 : vector<8x32xf32> to vector<8x32xbf16>
    %cst = arith.constant dense<0.000000e+00> : vector<8x96xf32>
    %12 = tpu.matmul %11, %3, %cst {dimension_numbers = #tpu.dot_dimension_numbers<[1], [0], [0], [1], [0, 0, 1, 1], [], []>} : vector<8x32xbf16>, vector<32x96xbf16>, vector<8x96xf32> -> vector<8x96xf32>
    %13 = arith.addf %12, %6 : vector<8x96xf32>
    %14 = vector.extract_strided_slice %10 {offsets = [0, 0], sizes = [8, 32], strides = [1, 1]} : vector<8x96xf32> to vector<8x32xf32>
    %15 = vector.extract_strided_slice %13 {offsets = [0, 0], sizes = [8, 32], strides = [1, 1]} : vector<8x96xf32> to vector<8x32xf32>
    %16 = arith.addf %14, %15 : vector<8x32xf32>
    %17 = arith.negf %16 : vector<8x32xf32>
    %18 = math.exp %17 : vector<8x32xf32>
    %cst_9 = arith.constant 1.000000e+00 : f32
    %19 = vector.broadcast %cst_9 : f32 to vector<8x32xf32>
    %20 = arith.addf %19, %18 : vector<8x32xf32>
    %21 = arith.divf %19, %20 : vector<8x32xf32>
    %22 = vector.extract_strided_slice %10 {offsets = [0, 32], sizes = [8, 32], strides = [1, 1]} : vector<8x96xf32> to vector<8x32xf32>
    %23 = vector.extract_strided_slice %13 {offsets = [0, 32], sizes = [8, 32], strides = [1, 1]} : vector<8x96xf32> to vector<8x32xf32>
    %24 = arith.addf %22, %23 : vector<8x32xf32>
    %25 = arith.negf %24 : vector<8x32xf32>
    %26 = math.exp %25 : vector<8x32xf32>
    %cst_10 = arith.constant 1.000000e+00 : f32
    %27 = vector.broadcast %cst_10 : f32 to vector<8x32xf32>
    %28 = arith.addf %27, %26 : vector<8x32xf32>
    %29 = arith.divf %27, %28 : vector<8x32xf32>
    %30 = vector.extract_strided_slice %10 {offsets = [0, 64], sizes = [8, 32], strides = [1, 1]} : vector<8x96xf32> to vector<8x32xf32>
    %31 = vector.extract_strided_slice %13 {offsets = [0, 64], sizes = [8, 32], strides = [1, 1]} : vector<8x96xf32> to vector<8x32xf32>
    %32 = arith.mulf %21, %31 : vector<8x32xf32>
    %33 = arith.addf %30, %32 : vector<8x32xf32>
    %34 = math.tanh %33 : vector<8x32xf32>
    %cst_11 = arith.constant 1.000000e+00 : f32
    %35 = vector.broadcast %cst_11 : f32 to vector<8x32xf32>
    %36 = arith.subf %35, %29 : vector<8x32xf32>
    %37 = arith.mulf %36, %34 : vector<8x32xf32>
    %38 = arith.mulf %29, %7 : vector<8x32xf32>
    %39 = arith.addf %37, %38 : vector<8x32xf32>
    %40 = arith.index_cast %c0_i32_6 : i32 to index
    %c0_12 = arith.constant 0 : index
    %c0_13 = arith.constant 0 : index
    %41 = vector.load %arg5[%40, %c0_12, %c0_13] : memref<8x8x32xf32, #tpu.memory_space<vmem>>, vector<1x8x32xf32>
    %42 = vector.shape_cast %41 : vector<1x8x32xf32> to vector<8x32xf32>
    %43 = vector.shape_cast %39 : vector<8x32xf32> to vector<1x8x32xf32>
    tpu.vector_store %arg5[%40, %c0_12, %c0_13], %43 {strides = array<i32>} : memref<8x8x32xf32, #tpu.memory_space<vmem>>, vector<1x8x32xf32>,
    %c1_i32 = arith.constant 1 : i32
    %44 = arith.index_cast %c1_i32 : i32 to index
    %c0_14 = arith.constant 0 : index
    %c0_15 = arith.constant 0 : index
    %45 = vector.load %arg2[%44, %c0_14, %c0_15] : memref<8x8x96xf32, #tpu.memory_space<vmem>>, vector<1x8x96xf32>
    %46 = vector.shape_cast %45 : vector<1x8x96xf32> to vector<8x96xf32>
    %47 = arith.truncf %39 : vector<8x32xf32> to vector<8x32xbf16>
    %cst_16 = arith.constant dense<0.000000e+00> : vector<8x96xf32>
    %48 = tpu.matmul %47, %3, %cst_16 {dimension_numbers = #tpu.dot_dimension_numbers<[1], [0], [0], [1], [0, 0, 1, 1], [], []>} : vector<8x32xbf16>, vector<32x96xbf16>, vector<8x96xf32> -> vector<8x96xf32>
    %49 = arith.addf %48, %6 : vector<8x96xf32>
    %50 = vector.extract_strided_slice %46 {offsets = [0, 0], sizes = [8, 32], strides = [1, 1]} : vector<8x96xf32> to vector<8x32xf32>
    %51 = vector.extract_strided_slice %49 {offsets = [0, 0], sizes = [8, 32], strides = [1, 1]} : vector<8x96xf32> to vector<8x32xf32>
    %52 = arith.addf %50, %51 : vector<8x32xf32>
    %53 = arith.negf %52 : vector<8x32xf32>
    %54 = math.exp %53 : vector<8x32xf32>
    %cst_17 = arith.constant 1.000000e+00 : f32
    %55 = vector.broadcast %cst_17 : f32 to vector<8x32xf32>
    %56 = arith.addf %55, %54 : vector<8x32xf32>
    %57 = arith.divf %55, %56 : vector<8x32xf32>
    %58 = vector.extract_strided_slice %46 {offsets = [0, 32], sizes = [8, 32], strides = [1, 1]} : vector<8x96xf32> to vector<8x32xf32>
    %59 = vector.extract_strided_slice %49 {offsets = [0, 32], sizes = [8, 32], strides = [1, 1]} : vector<8x96xf32> to vector<8x32xf32>
    %60 = arith.addf %58, %59 : vector<8x32xf32>
    %61 = arith.negf %60 : vector<8x32xf32>
    %62 = math.exp %61 : vector<8x32xf32>
    %cst_18 = arith.constant 1.000000e+00 : f32
    %63 = vector.broadcast %cst_18 : f32 to vector<8x32xf32>
    %64 = arith.addf %63, %62 : vector<8x32xf32>
    %65 = arith.divf %63, %64 : vector<8x32xf32>
    %66 = vector.extract_strided_slice %46 {offsets = [0, 64], sizes = [8, 32], strides = [1, 1]} : vector<8x96xf32> to vector<8x32xf32>
    %67 = vector.extract_strided_slice %49 {offsets = [0, 64], sizes = [8, 32], strides = [1, 1]} : vector<8x96xf32> to vector<8x32xf32>
    %68 = arith.mulf %57, %67 : vector<8x32xf32>
    %69 = arith.addf %66, %68 : vector<8x32xf32>
    %70 = math.tanh %69 : vector<8x32xf32>
    %cst_19 = arith.constant 1.000000e+00 : f32
    %71 = vector.broadcast %cst_19 : f32 to vector<8x32xf32>
    %72 = arith.subf %71, %65 : vector<8x32xf32>
    %73 = arith.mulf %72, %70 : vector<8x32xf32>
    %74 = arith.mulf %65, %39 : vector<8x32xf32>
    %75 = arith.addf %73, %74 : vector<8x32xf32>
    %76 = arith.index_cast %c1_i32 : i32 to index
    %c0_20 = arith.constant 0 : index
    %c0_21 = arith.constant 0 : index
    %77 = vector.load %arg5[%76, %c0_20, %c0_21] : memref<8x8x32xf32, #tpu.memory_space<vmem>>, vector<1x8x32xf32>
    %78 = vector.shape_cast %77 : vector<1x8x32xf32> to vector<8x32xf32>
    %79 = vector.shape_cast %75 : vector<8x32xf32> to vector<1x8x32xf32>
    tpu.vector_store %arg5[%76, %c0_20, %c0_21], %79 {strides = array<i32>} : memref<8x8x32xf32, #tpu.memory_space<vmem>>, vector<1x8x32xf32>,
    %c2_i32 = arith.constant 2 : i32
    %80 = arith.index_cast %c2_i32 : i32 to index
    %c0_22 = arith.constant 0 : index
    %c0_23 = arith.constant 0 : index
    %81 = vector.load %arg2[%80, %c0_22, %c0_23] : memref<8x8x96xf32, #tpu.memory_space<vmem>>, vector<1x8x96xf32>
    %82 = vector.shape_cast %81 : vector<1x8x96xf32> to vector<8x96xf32>
    %83 = arith.truncf %75 : vector<8x32xf32> to vector<8x32xbf16>
    %cst_24 = arith.constant dense<0.000000e+00> : vector<8x96xf32>
    %84 = tpu.matmul %83, %3, %cst_24 {dimension_numbers = #tpu.dot_dimension_numbers<[1], [0], [0], [1], [0, 0, 1, 1], [], []>} : vector<8x32xbf16>, vector<32x96xbf16>, vector<8x96xf32> -> vector<8x96xf32>
    %85 = arith.addf %84, %6 : vector<8x96xf32>
    %86 = vector.extract_strided_slice %82 {offsets = [0, 0], sizes = [8, 32], strides = [1, 1]} : vector<8x96xf32> to vector<8x32xf32>
    %87 = vector.extract_strided_slice %85 {offsets = [0, 0], sizes = [8, 32], strides = [1, 1]} : vector<8x96xf32> to vector<8x32xf32>
    %88 = arith.addf %86, %87 : vector<8x32xf32>
    %89 = arith.negf %88 : vector<8x32xf32>
    %90 = math.exp %89 : vector<8x32xf32>
    %cst_25 = arith.constant 1.000000e+00 : f32
    %91 = vector.broadcast %cst_25 : f32 to vector<8x32xf32>
    %92 = arith.addf %91, %90 : vector<8x32xf32>
    %93 = arith.divf %91, %92 : vector<8x32xf32>
    %94 = vector.extract_strided_slice %82 {offsets = [0, 32], sizes = [8, 32], strides = [1, 1]} : vector<8x96xf32> to vector<8x32xf32>
    %95 = vector.extract_strided_slice %85 {offsets = [0, 32], sizes = [8, 32], strides = [1, 1]} : vector<8x96xf32> to vector<8x32xf32>
    %96 = arith.addf %94, %95 : vector<8x32xf32>
    %97 = arith.negf %96 : vector<8x32xf32>
    %98 = math.exp %97 : vector<8x32xf32>
    %cst_26 = arith.constant 1.000000e+00 : f32
    %99 = vector.broadcast %cst_26 : f32 to vector<8x32xf32>
    %100 = arith.addf %99, %98 : vector<8x32xf32>
    %101 = arith.divf %99, %100 : vector<8x32xf32>
    %102 = vector.extract_strided_slice %82 {offsets = [0, 64], sizes = [8, 32], strides = [1, 1]} : vector<8x96xf32> to vector<8x32xf32>
    %103 = vector.extract_strided_slice %85 {offsets = [0, 64], sizes = [8, 32], strides = [1, 1]} : vector<8x96xf32> to vector<8x32xf32>
    %104 = arith.mulf %93, %103 : vector<8x32xf32>
    %105 = arith.addf %102, %104 : vector<8x32xf32>
    %106 = math.tanh %105 : vector<8x32xf32>
    %cst_27 = arith.constant 1.000000e+00 : f32
    %107 = vector.broadcast %cst_27 : f32 to vector<8x32xf32>
    %108 = arith.subf %107, %101 : vector<8x32xf32>
    %109 = arith.mulf %108, %106 : vector<8x32xf32>
    %110 = arith.mulf %101, %75 : vector<8x32xf32>
    %111 = arith.addf %109, %110 : vector<8x32xf32>
    %112 = arith.index_cast %c2_i32 : i32 to index
    %c0_28 = arith.constant 0 : index
    %c0_29 = arith.constant 0 : index
    %113 = vector.load %arg5[%112, %c0_28, %c0_29] : memref<8x8x32xf32, #tpu.memory_space<vmem>>, vector<1x8x32xf32>
    %114 = vector.shape_cast %113 : vector<1x8x32xf32> to vector<8x32xf32>
    %115 = vector.shape_cast %111 : vector<8x32xf32> to vector<1x8x32xf32>
    tpu.vector_store %arg5[%112, %c0_28, %c0_29], %115 {strides = array<i32>} : memref<8x8x32xf32, #tpu.memory_space<vmem>>, vector<1x8x32xf32>,
    %c3_i32 = arith.constant 3 : i32
    %116 = arith.index_cast %c3_i32 : i32 to index
    %c0_30 = arith.constant 0 : index
    %c0_31 = arith.constant 0 : index
    %117 = vector.load %arg2[%116, %c0_30, %c0_31] : memref<8x8x96xf32, #tpu.memory_space<vmem>>, vector<1x8x96xf32>
    %118 = vector.shape_cast %117 : vector<1x8x96xf32> to vector<8x96xf32>
    %119 = arith.truncf %111 : vector<8x32xf32> to vector<8x32xbf16>
    %cst_32 = arith.constant dense<0.000000e+00> : vector<8x96xf32>
    %120 = tpu.matmul %119, %3, %cst_32 {dimension_numbers = #tpu.dot_dimension_numbers<[1], [0], [0], [1], [0, 0, 1, 1], [], []>} : vector<8x32xbf16>, vector<32x96xbf16>, vector<8x96xf32> -> vector<8x96xf32>
    %121 = arith.addf %120, %6 : vector<8x96xf32>
    %122 = vector.extract_strided_slice %118 {offsets = [0, 0], sizes = [8, 32], strides = [1, 1]} : vector<8x96xf32> to vector<8x32xf32>
    %123 = vector.extract_strided_slice %121 {offsets = [0, 0], sizes = [8, 32], strides = [1, 1]} : vector<8x96xf32> to vector<8x32xf32>
    %124 = arith.addf %122, %123 : vector<8x32xf32>
    %125 = arith.negf %124 : vector<8x32xf32>
    %126 = math.exp %125 : vector<8x32xf32>
    %cst_33 = arith.constant 1.000000e+00 : f32
    %127 = vector.broadcast %cst_33 : f32 to vector<8x32xf32>
    %128 = arith.addf %127, %126 : vector<8x32xf32>
    %129 = arith.divf %127, %128 : vector<8x32xf32>
    %130 = vector.extract_strided_slice %118 {offsets = [0, 32], sizes = [8, 32], strides = [1, 1]} : vector<8x96xf32> to vector<8x32xf32>
    %131 = vector.extract_strided_slice %121 {offsets = [0, 32], sizes = [8, 32], strides = [1, 1]} : vector<8x96xf32> to vector<8x32xf32>
    %132 = arith.addf %130, %131 : vector<8x32xf32>
    %133 = arith.negf %132 : vector<8x32xf32>
    %134 = math.exp %133 : vector<8x32xf32>
    %cst_34 = arith.constant 1.000000e+00 : f32
    %135 = vector.broadcast %cst_34 : f32 to vector<8x32xf32>
    %136 = arith.addf %135, %134 : vector<8x32xf32>
    %137 = arith.divf %135, %136 : vector<8x32xf32>
    %138 = vector.extract_strided_slice %118 {offsets = [0, 64], sizes = [8, 32], strides = [1, 1]} : vector<8x96xf32> to vector<8x32xf32>
    %139 = vector.extract_strided_slice %121 {offsets = [0, 64], sizes = [8, 32], strides = [1, 1]} : vector<8x96xf32> to vector<8x32xf32>
    %140 = arith.mulf %129, %139 : vector<8x32xf32>
    %141 = arith.addf %138, %140 : vector<8x32xf32>
    %142 = math.tanh %141 : vector<8x32xf32>
    %cst_35 = arith.constant 1.000000e+00 : f32
    %143 = vector.broadcast %cst_35 : f32 to vector<8x32xf32>
    %144 = arith.subf %143, %137 : vector<8x32xf32>
    %145 = arith.mulf %144, %142 : vector<8x32xf32>
    %146 = arith.mulf %137, %111 : vector<8x32xf32>
    %147 = arith.addf %145, %146 : vector<8x32xf32>
    %148 = arith.index_cast %c3_i32 : i32 to index
    %c0_36 = arith.constant 0 : index
    %c0_37 = arith.constant 0 : index
    %149 = vector.load %arg5[%148, %c0_36, %c0_37] : memref<8x8x32xf32, #tpu.memory_space<vmem>>, vector<1x8x32xf32>
    %150 = vector.shape_cast %149 : vector<1x8x32xf32> to vector<8x32xf32>
    %151 = vector.shape_cast %147 : vector<8x32xf32> to vector<1x8x32xf32>
    tpu.vector_store %arg5[%148, %c0_36, %c0_37], %151 {strides = array<i32>} : memref<8x8x32xf32, #tpu.memory_space<vmem>>, vector<1x8x32xf32>,
    %c4_i32 = arith.constant 4 : i32
    %152 = arith.index_cast %c4_i32 : i32 to index
    %c0_38 = arith.constant 0 : index
    %c0_39 = arith.constant 0 : index
    %153 = vector.load %arg2[%152, %c0_38, %c0_39] : memref<8x8x96xf32, #tpu.memory_space<vmem>>, vector<1x8x96xf32>
    %154 = vector.shape_cast %153 : vector<1x8x96xf32> to vector<8x96xf32>
    %155 = arith.truncf %147 : vector<8x32xf32> to vector<8x32xbf16>
    %cst_40 = arith.constant dense<0.000000e+00> : vector<8x96xf32>
    %156 = tpu.matmul %155, %3, %cst_40 {dimension_numbers = #tpu.dot_dimension_numbers<[1], [0], [0], [1], [0, 0, 1, 1], [], []>} : vector<8x32xbf16>, vector<32x96xbf16>, vector<8x96xf32> -> vector<8x96xf32>
    %157 = arith.addf %156, %6 : vector<8x96xf32>
    %158 = vector.extract_strided_slice %154 {offsets = [0, 0], sizes = [8, 32], strides = [1, 1]} : vector<8x96xf32> to vector<8x32xf32>
    %159 = vector.extract_strided_slice %157 {offsets = [0, 0], sizes = [8, 32], strides = [1, 1]} : vector<8x96xf32> to vector<8x32xf32>
    %160 = arith.addf %158, %159 : vector<8x32xf32>
    %161 = arith.negf %160 : vector<8x32xf32>
    %162 = math.exp %161 : vector<8x32xf32>
    %cst_41 = arith.constant 1.000000e+00 : f32
    %163 = vector.broadcast %cst_41 : f32 to vector<8x32xf32>
    %164 = arith.addf %163, %162 : vector<8x32xf32>
    %165 = arith.divf %163, %164 : vector<8x32xf32>
    %166 = vector.extract_strided_slice %154 {offsets = [0, 32], sizes = [8, 32], strides = [1, 1]} : vector<8x96xf32> to vector<8x32xf32>
    %167 = vector.extract_strided_slice %157 {offsets = [0, 32], sizes = [8, 32], strides = [1, 1]} : vector<8x96xf32> to vector<8x32xf32>
    %168 = arith.addf %166, %167 : vector<8x32xf32>
    %169 = arith.negf %168 : vector<8x32xf32>
    %170 = math.exp %169 : vector<8x32xf32>
    %cst_42 = arith.constant 1.000000e+00 : f32
    %171 = vector.broadcast %cst_42 : f32 to vector<8x32xf32>
    %172 = arith.addf %171, %170 : vector<8x32xf32>
    %173 = arith.divf %171, %172 : vector<8x32xf32>
    %174 = vector.extract_strided_slice %154 {offsets = [0, 64], sizes = [8, 32], strides = [1, 1]} : vector<8x96xf32> to vector<8x32xf32>
    %175 = vector.extract_strided_slice %157 {offsets = [0, 64], sizes = [8, 32], strides = [1, 1]} : vector<8x96xf32> to vector<8x32xf32>
    %176 = arith.mulf %165, %175 : vector<8x32xf32>
    %177 = arith.addf %174, %176 : vector<8x32xf32>
    %178 = math.tanh %177 : vector<8x32xf32>
    %cst_43 = arith.constant 1.000000e+00 : f32
    %179 = vector.broadcast %cst_43 : f32 to vector<8x32xf32>
    %180 = arith.subf %179, %173 : vector<8x32xf32>
    %181 = arith.mulf %180, %178 : vector<8x32xf32>
    %182 = arith.mulf %173, %147 : vector<8x32xf32>
    %183 = arith.addf %181, %182 : vector<8x32xf32>
    %184 = arith.index_cast %c4_i32 : i32 to index
    %c0_44 = arith.constant 0 : index
    %c0_45 = arith.constant 0 : index
    %185 = vector.load %arg5[%184, %c0_44, %c0_45] : memref<8x8x32xf32, #tpu.memory_space<vmem>>, vector<1x8x32xf32>
    %186 = vector.shape_cast %185 : vector<1x8x32xf32> to vector<8x32xf32>
    %187 = vector.shape_cast %183 : vector<8x32xf32> to vector<1x8x32xf32>
    tpu.vector_store %arg5[%184, %c0_44, %c0_45], %187 {strides = array<i32>} : memref<8x8x32xf32, #tpu.memory_space<vmem>>, vector<1x8x32xf32>,
    %c5_i32 = arith.constant 5 : i32
    %188 = arith.index_cast %c5_i32 : i32 to index
    %c0_46 = arith.constant 0 : index
    %c0_47 = arith.constant 0 : index
    %189 = vector.load %arg2[%188, %c0_46, %c0_47] : memref<8x8x96xf32, #tpu.memory_space<vmem>>, vector<1x8x96xf32>
    %190 = vector.shape_cast %189 : vector<1x8x96xf32> to vector<8x96xf32>
    %191 = arith.truncf %183 : vector<8x32xf32> to vector<8x32xbf16>
    %cst_48 = arith.constant dense<0.000000e+00> : vector<8x96xf32>
    %192 = tpu.matmul %191, %3, %cst_48 {dimension_numbers = #tpu.dot_dimension_numbers<[1], [0], [0], [1], [0, 0, 1, 1], [], []>} : vector<8x32xbf16>, vector<32x96xbf16>, vector<8x96xf32> -> vector<8x96xf32>
    %193 = arith.addf %192, %6 : vector<8x96xf32>
    %194 = vector.extract_strided_slice %190 {offsets = [0, 0], sizes = [8, 32], strides = [1, 1]} : vector<8x96xf32> to vector<8x32xf32>
    %195 = vector.extract_strided_slice %193 {offsets = [0, 0], sizes = [8, 32], strides = [1, 1]} : vector<8x96xf32> to vector<8x32xf32>
    %196 = arith.addf %194, %195 : vector<8x32xf32>
    %197 = arith.negf %196 : vector<8x32xf32>
    %198 = math.exp %197 : vector<8x32xf32>
    %cst_49 = arith.constant 1.000000e+00 : f32
    %199 = vector.broadcast %cst_49 : f32 to vector<8x32xf32>
    %200 = arith.addf %199, %198 : vector<8x32xf32>
    %201 = arith.divf %199, %200 : vector<8x32xf32>
    %202 = vector.extract_strided_slice %190 {offsets = [0, 32], sizes = [8, 32], strides = [1, 1]} : vector<8x96xf32> to vector<8x32xf32>
    %203 = vector.extract_strided_slice %193 {offsets = [0, 32], sizes = [8, 32], strides = [1, 1]} : vector<8x96xf32> to vector<8x32xf32>
    %204 = arith.addf %202, %203 : vector<8x32xf32>
    %205 = arith.negf %204 : vector<8x32xf32>
    %206 = math.exp %205 : vector<8x32xf32>
    %cst_50 = arith.constant 1.000000e+00 : f32
    %207 = vector.broadcast %cst_50 : f32 to vector<8x32xf32>
    %208 = arith.addf %207, %206 : vector<8x32xf32>
    %209 = arith.divf %207, %208 : vector<8x32xf32>
    %210 = vector.extract_strided_slice %190 {offsets = [0, 64], sizes = [8, 32], strides = [1, 1]} : vector<8x96xf32> to vector<8x32xf32>
    %211 = vector.extract_strided_slice %193 {offsets = [0, 64], sizes = [8, 32], strides = [1, 1]} : vector<8x96xf32> to vector<8x32xf32>
    %212 = arith.mulf %201, %211 : vector<8x32xf32>
    %213 = arith.addf %210, %212 : vector<8x32xf32>
    %214 = math.tanh %213 : vector<8x32xf32>
    %cst_51 = arith.constant 1.000000e+00 : f32
    %215 = vector.broadcast %cst_51 : f32 to vector<8x32xf32>
    %216 = arith.subf %215, %209 : vector<8x32xf32>
    %217 = arith.mulf %216, %214 : vector<8x32xf32>
    %218 = arith.mulf %209, %183 : vector<8x32xf32>
    %219 = arith.addf %217, %218 : vector<8x32xf32>
    %220 = arith.index_cast %c5_i32 : i32 to index
    %c0_52 = arith.constant 0 : index
    %c0_53 = arith.constant 0 : index
    %221 = vector.load %arg5[%220, %c0_52, %c0_53] : memref<8x8x32xf32, #tpu.memory_space<vmem>>, vector<1x8x32xf32>
    %222 = vector.shape_cast %221 : vector<1x8x32xf32> to vector<8x32xf32>
    %223 = vector.shape_cast %219 : vector<8x32xf32> to vector<1x8x32xf32>
    tpu.vector_store %arg5[%220, %c0_52, %c0_53], %223 {strides = array<i32>} : memref<8x8x32xf32, #tpu.memory_space<vmem>>, vector<1x8x32xf32>,
    %c6_i32 = arith.constant 6 : i32
    %224 = arith.index_cast %c6_i32 : i32 to index
    %c0_54 = arith.constant 0 : index
    %c0_55 = arith.constant 0 : index
    %225 = vector.load %arg2[%224, %c0_54, %c0_55] : memref<8x8x96xf32, #tpu.memory_space<vmem>>, vector<1x8x96xf32>
    %226 = vector.shape_cast %225 : vector<1x8x96xf32> to vector<8x96xf32>
    %227 = arith.truncf %219 : vector<8x32xf32> to vector<8x32xbf16>
    %cst_56 = arith.constant dense<0.000000e+00> : vector<8x96xf32>
    %228 = tpu.matmul %227, %3, %cst_56 {dimension_numbers = #tpu.dot_dimension_numbers<[1], [0], [0], [1], [0, 0, 1, 1], [], []>} : vector<8x32xbf16>, vector<32x96xbf16>, vector<8x96xf32> -> vector<8x96xf32>
    %229 = arith.addf %228, %6 : vector<8x96xf32>
    %230 = vector.extract_strided_slice %226 {offsets = [0, 0], sizes = [8, 32], strides = [1, 1]} : vector<8x96xf32> to vector<8x32xf32>
    %231 = vector.extract_strided_slice %229 {offsets = [0, 0], sizes = [8, 32], strides = [1, 1]} : vector<8x96xf32> to vector<8x32xf32>
    %232 = arith.addf %230, %231 : vector<8x32xf32>
    %233 = arith.negf %232 : vector<8x32xf32>
    %234 = math.exp %233 : vector<8x32xf32>
    %cst_57 = arith.constant 1.000000e+00 : f32
    %235 = vector.broadcast %cst_57 : f32 to vector<8x32xf32>
    %236 = arith.addf %235, %234 : vector<8x32xf32>
    %237 = arith.divf %235, %236 : vector<8x32xf32>
    %238 = vector.extract_strided_slice %226 {offsets = [0, 32], sizes = [8, 32], strides = [1, 1]} : vector<8x96xf32> to vector<8x32xf32>
    %239 = vector.extract_strided_slice %229 {offsets = [0, 32], sizes = [8, 32], strides = [1, 1]} : vector<8x96xf32> to vector<8x32xf32>
    %240 = arith.addf %238, %239 : vector<8x32xf32>
    %241 = arith.negf %240 : vector<8x32xf32>
    %242 = math.exp %241 : vector<8x32xf32>
    %cst_58 = arith.constant 1.000000e+00 : f32
    %243 = vector.broadcast %cst_58 : f32 to vector<8x32xf32>
    %244 = arith.addf %243, %242 : vector<8x32xf32>
    %245 = arith.divf %243, %244 : vector<8x32xf32>
    %246 = vector.extract_strided_slice %226 {offsets = [0, 64], sizes = [8, 32], strides = [1, 1]} : vector<8x96xf32> to vector<8x32xf32>
    %247 = vector.extract_strided_slice %229 {offsets = [0, 64], sizes = [8, 32], strides = [1, 1]} : vector<8x96xf32> to vector<8x32xf32>
    %248 = arith.mulf %237, %247 : vector<8x32xf32>
    %249 = arith.addf %246, %248 : vector<8x32xf32>
    %250 = math.tanh %249 : vector<8x32xf32>
    %cst_59 = arith.constant 1.000000e+00 : f32
    %251 = vector.broadcast %cst_59 : f32 to vector<8x32xf32>
    %252 = arith.subf %251, %245 : vector<8x32xf32>
    %253 = arith.mulf %252, %250 : vector<8x32xf32>
    %254 = arith.mulf %245, %219 : vector<8x32xf32>
    %255 = arith.addf %253, %254 : vector<8x32xf32>
    %256 = arith.index_cast %c6_i32 : i32 to index
    %c0_60 = arith.constant 0 : index
    %c0_61 = arith.constant 0 : index
    %257 = vector.load %arg5[%256, %c0_60, %c0_61] : memref<8x8x32xf32, #tpu.memory_space<vmem>>, vector<1x8x32xf32>
    %258 = vector.shape_cast %257 : vector<1x8x32xf32> to vector<8x32xf32>
    %259 = vector.shape_cast %255 : vector<8x32xf32> to vector<1x8x32xf32>
    tpu.vector_store %arg5[%256, %c0_60, %c0_61], %259 {strides = array<i32>} : memref<8x8x32xf32, #tpu.memory_space<vmem>>, vector<1x8x32xf32>,
    %c7_i32 = arith.constant 7 : i32
    %260 = arith.index_cast %c7_i32 : i32 to index
    %c0_62 = arith.constant 0 : index
    %c0_63 = arith.constant 0 : index
    %261 = vector.load %arg2[%260, %c0_62, %c0_63] : memref<8x8x96xf32, #tpu.memory_space<vmem>>, vector<1x8x96xf32>
    %262 = vector.shape_cast %261 : vector<1x8x96xf32> to vector<8x96xf32>
    %263 = arith.truncf %255 : vector<8x32xf32> to vector<8x32xbf16>
    %cst_64 = arith.constant dense<0.000000e+00> : vector<8x96xf32>
    %264 = tpu.matmul %263, %3, %cst_64 {dimension_numbers = #tpu.dot_dimension_numbers<[1], [0], [0], [1], [0, 0, 1, 1], [], []>} : vector<8x32xbf16>, vector<32x96xbf16>, vector<8x96xf32> -> vector<8x96xf32>
    %265 = arith.addf %264, %6 : vector<8x96xf32>
    %266 = vector.extract_strided_slice %262 {offsets = [0, 0], sizes = [8, 32], strides = [1, 1]} : vector<8x96xf32> to vector<8x32xf32>
    %267 = vector.extract_strided_slice %265 {offsets = [0, 0], sizes = [8, 32], strides = [1, 1]} : vector<8x96xf32> to vector<8x32xf32>
    %268 = arith.addf %266, %267 : vector<8x32xf32>
    %269 = arith.negf %268 : vector<8x32xf32>
    %270 = math.exp %269 : vector<8x32xf32>
    %cst_65 = arith.constant 1.000000e+00 : f32
    %271 = vector.broadcast %cst_65 : f32 to vector<8x32xf32>
    %272 = arith.addf %271, %270 : vector<8x32xf32>
    %273 = arith.divf %271, %272 : vector<8x32xf32>
    %274 = vector.extract_strided_slice %262 {offsets = [0, 32], sizes = [8, 32], strides = [1, 1]} : vector<8x96xf32> to vector<8x32xf32>
    %275 = vector.extract_strided_slice %265 {offsets = [0, 32], sizes = [8, 32], strides = [1, 1]} : vector<8x96xf32> to vector<8x32xf32>
    %276 = arith.addf %274, %275 : vector<8x32xf32>
    %277 = arith.negf %276 : vector<8x32xf32>
    %278 = math.exp %277 : vector<8x32xf32>
    %cst_66 = arith.constant 1.000000e+00 : f32
    %279 = vector.broadcast %cst_66 : f32 to vector<8x32xf32>
    %280 = arith.addf %279, %278 : vector<8x32xf32>
    %281 = arith.divf %279, %280 : vector<8x32xf32>
    %282 = vector.extract_strided_slice %262 {offsets = [0, 64], sizes = [8, 32], strides = [1, 1]} : vector<8x96xf32> to vector<8x32xf32>
    %283 = vector.extract_strided_slice %265 {offsets = [0, 64], sizes = [8, 32], strides = [1, 1]} : vector<8x96xf32> to vector<8x32xf32>
    %284 = arith.mulf %273, %283 : vector<8x32xf32>
    %285 = arith.addf %282, %284 : vector<8x32xf32>
    %286 = math.tanh %285 : vector<8x32xf32>
    %cst_67 = arith.constant 1.000000e+00 : f32
    %287 = vector.broadcast %cst_67 : f32 to vector<8x32xf32>
    %288 = arith.subf %287, %281 : vector<8x32xf32>
    %289 = arith.mulf %288, %286 : vector<8x32xf32>
    %290 = arith.mulf %281, %255 : vector<8x32xf32>
    %291 = arith.addf %289, %290 : vector<8x32xf32>
    %292 = arith.index_cast %c7_i32 : i32 to index
    %c0_68 = arith.constant 0 : index
    %c0_69 = arith.constant 0 : index
    %293 = vector.load %arg5[%292, %c0_68, %c0_69] : memref<8x8x32xf32, #tpu.memory_space<vmem>>, vector<1x8x32xf32>
    %294 = vector.shape_cast %293 : vector<1x8x32xf32> to vector<8x32xf32>
    %295 = vector.shape_cast %291 : vector<8x32xf32> to vector<1x8x32xf32>
    tpu.vector_store %arg5[%292, %c0_68, %c0_69], %295 {strides = array<i32>} : memref<8x8x32xf32, #tpu.memory_space<vmem>>, vector<1x8x32xf32>,
    %c8_i32 = arith.constant 8 : i32
    %c0_70 = arith.constant 0 : index
    %c0_71 = arith.constant 0 : index
    %296 = vector.load %arg6[%c0_70, %c0_71] : memref<8x32xf32, #tpu.memory_space<vmem>>, vector<8x32xf32>
    tpu.vector_store %arg6[%c0_70, %c0_71], %291 {strides = array<i32>} : memref<8x32xf32, #tpu.memory_space<vmem>>, vector<8x32xf32>,
    return
  }
  func.func @transform_0(%arg0: i32, %arg1: i32) -> (i32, i32, i32) {
    %c0_i32 = arith.constant 0 : i32
    %c0_i32_0 = arith.constant 0 : i32
    return %arg1, %arg0, %c0_i32 : i32, i32, i32
  }
  func.func @transform_1(%arg0: i32, %arg1: i32) -> (i32, i32) {
    %c0_i32 = arith.constant 0 : i32
    %c0_i32_0 = arith.constant 0 : i32
    %c0_i32_1 = arith.constant 0 : i32
    return %c0_i32, %c0_i32_0 : i32, i32
  }
  func.func @transform_2(%arg0: i32, %arg1: i32) -> (i32, i32) {
    %c0_i32 = arith.constant 0 : i32
    %c0_i32_0 = arith.constant 0 : i32
    %c0_i32_1 = arith.constant 0 : i32
    return %c0_i32, %c0_i32_0 : i32, i32
  }
  func.func @transform_3(%arg0: i32, %arg1: i32) -> (i32, i32, i32) {
    %c0_i32 = arith.constant 0 : i32
    %c0_i32_0 = arith.constant 0 : i32
    return %arg1, %arg0, %c0_i32 : i32, i32, i32
  }
}

</mosaic_0001>

<llo_original>
// kernel: tpu_custom_call.1
$region0: #{tpu_custom_call.1}
  #allocation0 [shape = 'u32[]', space=smem, size = 0x4, offset = 0x4, fixed_abs, tag = 'smem constant byte address 0x4 - core index']
  #allocation1 [shape = 'u32[144,128]{1,0:T(1,128)}', space=vmem, size = 0x12000, scoped, tag = 'internal scratch']
  #allocation2 [shape = 'f32[8,32]{1,0:T(8,128)}', space=vmem, size = 0x1000, scoped, tag = 'scratch operand']
  %s0 = inlined_call_operand.hbm [shape: f32[8,8,96], index: 0, kind: input, shape index: {}]
  %s1 = inlined_call_operand.hbm [shape: bf16[32,96], index: 1, kind: input, shape index: {}]
  %s2 = inlined_call_operand.vmem [shape: f32[1,96], index: 2, kind: input, shape index: {}]
  %s3 = inlined_call_operand.hbm [shape: f32[8,8,32], index: 3, kind: output, shape index: {}]
  %s4 = sld [smem:[#allocation0]]
  $region34: #{tpu_custom_call.1} parent=0
    _
  %s6 = ssub.s32 1, %s4
  %s7 = scalar_select 0, %s6, %s4
  $region1: #{tpu_custom_call.1} parent=0
    #allocation3 [shape = 'u8[32768]{0}', space=vmem, size = 0x8000, scoped, tag = 'input window, operand 0, single buffered']
    #allocation4 [shape = 's32[1]{0}', space=sflag, size = 0x4, scoped, tag = 'scoped memory for tpu_custom_call.1']
    #allocation5 [shape = 's32[1]{0}', space=sflag, size = 0x4, scoped, tag = 'scoped memory for tpu_custom_call.1']
    #allocation6 [shape = 'u8[8192]{0}', space=vmem, size = 0x2000, scoped, tag = 'input window, operand 1, single buffered']
    #allocation7 [shape = 's32[1]{0}', space=sflag, size = 0x4, scoped, tag = 'scoped memory for tpu_custom_call.1']
    #allocation8 [shape = 'u8[32768]{0}', space=vmem, size = 0x8000, scoped, tag = 'output window, operand 0, single buffered']
    %8 = vsyncpa [#allocation4], 0
    %9 = vsyncpa [#allocation7], 0
    %10 = vsyncpa [#allocation5], 0
    // Predicated region
    $region2: #{tpu_custom_call.1} parent=1 // pred_check
      _
    $region3: #{tpu_custom_call.1} parent=1 // pred_check_branch
      %12 = sbr.rel (0) target = $region5
    $region4: #{tpu_custom_call.1} parent=1 // pred_region
      %s14 = ssub.s32 1024, 1024
      %15 = vsyncadd [#allocation4], %s14
      %s16 = sshll.u32 [#allocation3], 4
      %s17 = int_to_ptr.vmem [resolvable:$true] %s16
      %22 = dma.hbm_to_vmem [thread:$0]  %s0, 1024, %s17, [#allocation4], 128, 128, 8
    $region5: #{tpu_custom_call.1} parent=1 // pred_fallthru
      _
    // Predicated region
    $region6: #{tpu_custom_call.1} parent=1 // pred_check
      _
    $region7: #{tpu_custom_call.1} parent=1 // pred_check_branch
      %24 = sbr.rel (0) target = $region9
    $region8: #{tpu_custom_call.1} parent=1 // pred_region
      %s26 = ssub.s32 256, 256
      %27 = vsyncadd [#allocation7], %s26
      %s28 = sshll.u32 [#allocation6], 4
      %s29 = int_to_ptr.vmem [resolvable:$true] %s28
      %34 = dma.hbm_to_vmem [thread:$0]  %s1, 256, %s29, [#allocation7], 64, 64, 4
    $region9: #{tpu_custom_call.1} parent=1 // pred_fallthru
      _
    // Predicated region
    $region10: #{tpu_custom_call.1} parent=1 // pred_check
      _
    $region11: #{tpu_custom_call.1} parent=1 // pred_check_branch
      %36 = sbr.rel (0) target = $region13
    $region12: #{tpu_custom_call.1} parent=1 // pred_region
      _
    $region13: #{tpu_custom_call.1} parent=1 // pred_fallthru
      _
    // Predicated region
    $region14: #{tpu_custom_call.1} parent=1 // pred_check
      _
    $region15: #{tpu_custom_call.1} parent=1 // pred_check_branch
      %38 = sbr.rel (0) target = $region17
    $region16: #{tpu_custom_call.1} parent=1 // pred_region
      %39 = dma.done [#allocation4], 1024
    $region17: #{tpu_custom_call.1} parent=1 // pred_fallthru
      _
    // Predicated region
    $region18: #{tpu_custom_call.1} parent=1 // pred_check
      _
    $region19: #{tpu_custom_call.1} parent=1 // pred_check_branch
      %41 = sbr.rel (0) target = $region21
    $region20: #{tpu_custom_call.1} parent=1 // pred_region
      %42 = dma.done [#allocation7], 256
    $region21: #{tpu_custom_call.1} parent=1 // pred_fallthru
      _
    %p44 = scmp.eq.s32.totalorder 0, 0
    // Predicated region
    $region22: #{tpu_custom_call.1} parent=1 // pred_check
      %p45 = pneg %p44
    $region23: #{tpu_custom_call.1} parent=1 // pred_check_branch
      %47 = sbr.rel (%p45) target = $region25
    $region24: #{tpu_custom_call.1} parent=1 // pred_region
      %vm48 = vcmask 261120
      %49 = vst.msk [vmem:[#allocation2] sm:$0xff] %vm48, 0.0
    $region25: #{tpu_custom_call.1} parent=1 // pred_fallthru
      _
    %v50 = vld [vmem:[#allocation6] sm:$0xf]
    %v51 = vld [vmem:[#allocation6 + $0x4] sm:$0xf]
    %v52 = vld [vmem:[#allocation6 + $0x8] sm:$0xf]
    %v53 = vld [vmem:[#allocation6 + $0xc] sm:$0xf]
    %v54 = vld [vmem:[%s2] sm:$0x1]
    %v56 = vlaneseq
    %v57 = vshrl.u32 %v56, 7
    %v58 = vsub.s32 0, %v57
    %v59 = vrot.slane %v54, %v58
    %v61 = vld [vmem:[#allocation2] sm:$0xff]
    %v62 = vld [vmem:[#allocation3] sm:$0xff]
    %v63 = vpack.c.bf16 %v61, %v61
    %v68 = vunpack.c.l.b16 %v50
    %v69 = vunpack.c.l.b16 %v51
    %v70 = vunpack.c.l.b16 %v52
    %v71 = vunpack.c.l.b16 %v53
    %v72 = vpack.c.b16 %v69, %v68
    %v73 = vpack.c.b16 %v71, %v70
    %vm76 = vcmask 261120
    %v78 = vsel %vm76, %v63, 0
    %80 = vmatprep.subr.bf16.mxu0 0
    %81 = vmatpush1.bf16.msra.mxu0 %v72
    %82 = vmatprep.subr.bf16.mxu0 0
    %83 = vmatpush1.bf16.msra.mxu0 %v73
    %84 = vmatprep.subr.bf16.mxu0 0
    %85 = vmatpush1.bf16.msra.mxu0 0
    %86 = vmatprep.subr.bf16.mxu0 0
    %87 = vmatpush1.bf16.msra.mxu0 0
    %88 = vmatprep.subr.bf16.mxu0 0
    %89 = vmatpush1.bf16.msra.mxu0 0
    %90 = vmatprep.subr.bf16.mxu0 0
    %91 = vmatpush1.bf16.msra.mxu0 0
    %92 = vmatprep.subr.bf16.mxu0 0
    %93 = vmatpush1.bf16.msra.mxu0 0
    %94 = vmatprep.subr.bf16.mxu0 0
    %95 = vmatpush1.bf16.msra.mxu0 0
    %96 = vmatprep.subr.bf16.mxu0 0
    %97 = vmatpush1.bf16.msra.mxu0 0
    %98 = vmatprep.subr.bf16.mxu0 0
    %99 = vmatpush1.bf16.msra.mxu0 0
    %100 = vmatprep.subr.bf16.mxu0 0
    %101 = vmatpush1.bf16.msra.mxu0 0
    %102 = vmatprep.subr.bf16.mxu0 0
    %103 = vmatpush1.bf16.msra.mxu0 0
    %104 = vmatprep.subr.bf16.mxu0 0
    %105 = vmatpush1.bf16.msra.mxu0 0
    %106 = vmatprep.subr.bf16.mxu0 0
    %107 = vmatpush1.bf16.msra.mxu0 0
    %108 = vmatprep.subr.bf16.mxu0 0
    %109 = vmatpush1.bf16.msra.mxu0 0
    %110 = vmatprep.subr.bf16.mxu0 0
    %111 = vmatpush1.bf16.msra.mxu0 0
    %112 = vmatprep.mubr.bf16.mxu0 0
    %113 = vmatmul.mubr.bf16.gmra.mrb[0].mxu0 %v78
    %v114 = vpop.f32.mrb[0].mxu0
    %v115 = vadd.f32 %v59, %v114
    %v116 = vpop.f32.mrb[0].mxu0
    %v117 = vpop.f32.mrb[0].mxu0
    %v118 = vpop.f32.mrb[0].mxu0
    %119 = vdwg.mxu0
    %v120 = vadd.f32 %v62, %v115
    %v121 = vxor.u32 %v120, 2147483648
    %v122 = vmul.f32 %v121, 1.442695
    %v123 = vpow.pop %v122
    %v124 = vadd.f32 %v123, 1.0
    %v125 = vrcp.pop %v124
    %v126 = vmul.f32 1.0, %v125
    %128 = vrot.lane.b32.xlu0 %v115, 64
    %v129 = vpop.permute.xlu0 %128
    %v131 = vmul.f32 %v126, %v129
    %133 = vrot.lane.b32.xlu0 %v131, 64
    %v134 = vpop.permute.xlu0 %133
    %v136 = vadd.f32 %v62, %v134
    %v137 = vtanh.pop %v136
    %v138 = vsub.f32 1.0, %v126
    %140 = vrot.lane.b32.xlu0 %v137, 96
    %v141 = vpop.permute.xlu0 %140
    %v143 = vmul.f32 %v138, %v141
    %145 = vrot.lane.b32.xlu0 %v61, 32
    %v146 = vpop.permute.xlu0 %145
    %v148 = vmul.f32 %v126, %v146
    %v149 = vadd.f32 %v143, %v148
    %151 = vrot.lane.b32.xlu0 %v149, 96
    %v152 = vpop.permute.xlu0 %151
    %154 = vst.msk [vmem:[#allocation8] sm:$0xff] %vm76, %v152
    %s155 = scalar_lea.vmem [#allocation3], 8
    %v156 = vld [vmem:[%s155] sm:$0xff]
    %v157 = vpack.c.bf16 %v149, %v149
    %159 = vrot.lane.b32.xlu0 %v157, 96
    %v160 = vpop.permute.xlu0 %159
    %v162 = vsel %vm76, %v160, 0
    %164 = vmatprep.subr.bf16.mxu0 0
    %165 = vmatpush1.bf16.msra.mxu0 %v72
    %166 = vmatprep.subr.bf16.mxu0 0
    %167 = vmatpush1.bf16.msra.mxu0 %v73
    %168 = vmatprep.subr.bf16.mxu0 0
    %169 = vmatpush1.bf16.msra.mxu0 0
    %170 = vmatprep.subr.bf16.mxu0 0
    %171 = vmatpush1.bf16.msra.mxu0 0
    %172 = vmatprep.subr.bf16.mxu0 0
    %173 = vmatpush1.bf16.msra.mxu0 0
    %174 = vmatprep.subr.bf16.mxu0 0
    %175 = vmatpush1.bf16.msra.mxu0 0
    %176 = vmatprep.subr.bf16.mxu0 0
    %177 = vmatpush1.bf16.msra.mxu0 0
    %178 = vmatprep.subr.bf16.mxu0 0
    %179 = vmatpush1.bf16.msra.mxu0 0
    %180 = vmatprep.subr.bf16.mxu0 0
    %181 = vmatpush1.bf16.msra.mxu0 0
    %182 = vmatprep.subr.bf16.mxu0 0
    %183 = vmatpush1.bf16.msra.mxu0 0
    %184 = vmatprep.subr.bf16.mxu0 0
    %185 = vmatpush1.bf16.msra.mxu0 0
    %186 = vmatprep.subr.bf16.mxu0 0
    %187 = vmatpush1.bf16.msra.mxu0 0
    %188 = vmatprep.subr.bf16.mxu0 0
    %189 = vmatpush1.bf16.msra.mxu0 0
    %190 = vmatprep.subr.bf16.mxu0 0
    %191 = vmatpush1.bf16.msra.mxu0 0
    %192 = vmatprep.subr.bf16.mxu0 0
    %193 = vmatpush1.bf16.msra.mxu0 0
    %194 = vmatprep.subr.bf16.mxu0 0
    %195 = vmatpush1.bf16.msra.mxu0 0
    %196 = vmatprep.mubr.bf16.mxu0 0
    %197 = vmatmul.mubr.bf16.gmra.mrb[0].mxu0 %v162
    %v198 = vpop.f32.mrb[0].mxu0
    %v199 = vadd.f32 %v59, %v198
    %v200 = vpop.f32.mrb[0].mxu0
    %v201 = vpop.f32.mrb[0].mxu0
    %v202 = vpop.f32.mrb[0].mxu0
    %203 = vdwg.mxu0
    %v204 = vadd.f32 %v156, %v199
    %v205 = vxor.u32 %v204, 2147483648
    %v206 = vmul.f32 %v205, 1.442695
    %v207 = vpow.pop %v206
    %v208 = vadd.f32 %v207, 1.0
    %v209 = vrcp.pop %v208
    %v210 = vmul.f32 1.0, %v209
    %212 = vrot.lane.b32.xlu0 %v199, 64
    %v213 = vpop.permute.xlu0 %212
    %v215 = vmul.f32 %v210, %v213
    %217 = vrot.lane.b32.xlu0 %v215, 64
    %v218 = vpop.permute.xlu0 %217
    %v220 = vadd.f32 %v156, %v218
    %v221 = vtanh.pop %v220
    %v222 = vsub.f32 1.0, %v210
    %224 = vrot.lane.b32.xlu0 %v221, 96
    %v225 = vpop.permute.xlu0 %224
    %v227 = vmul.f32 %v222, %v225
    %v228 = vmul.f32 %v210, %v149
    %v229 = vadd.f32 %v227, %v228
    %231 = vrot.lane.b32.xlu0 %v229, 96
    %v232 = vpop.permute.xlu0 %231
    %s234 = scalar_lea.vmem [#allocation8], 8
    %235 = vst.msk [vmem:[%s234] sm:$0xff] %vm76, %v232
    %s236 = scalar_lea.vmem [#allocation3], 16
    %v237 = vld [vmem:[%s236] sm:$0xff]
    %v238 = vpack.c.bf16 %v229, %v229
    %240 = vrot.lane.b32.xlu0 %v238, 96
    %v241 = vpop.permute.xlu0 %240
    %v243 = vsel %vm76, %v241, 0
    %245 = vmatprep.subr.bf16.mxu0 0
    %246 = vmatpush1.bf16.msra.mxu0 %v72
    %247 = vmatprep.subr.bf16.mxu0 0
    %248 = vmatpush1.bf16.msra.mxu0 %v73
    %249 = vmatprep.subr.bf16.mxu0 0
    %250 = vmatpush1.bf16.msra.mxu0 0
    %251 = vmatprep.subr.bf16.mxu0 0
    %252 = vmatpush1.bf16.msra.mxu0 0
    %253 = vmatprep.subr.bf16.mxu0 0
    %254 = vmatpush1.bf16.msra.mxu0 0
    %255 = vmatprep.subr.bf16.mxu0 0
    %256 = vmatpush1.bf16.msra.mxu0 0
    %257 = vmatprep.subr.bf16.mxu0 0
    %258 = vmatpush1.bf16.msra.mxu0 0
    %259 = vmatprep.subr.bf16.mxu0 0
    %260 = vmatpush1.bf16.msra.mxu0 0
    %261 = vmatprep.subr.bf16.mxu0 0
    %262 = vmatpush1.bf16.msra.mxu0 0
    %263 = vmatprep.subr.bf16.mxu0 0
    %264 = vmatpush1.bf16.msra.mxu0 0
    %265 = vmatprep.subr.bf16.mxu0 0
    %266 = vmatpush1.bf16.msra.mxu0 0
    %267 = vmatprep.subr.bf16.mxu0 0
    %268 = vmatpush1.bf16.msra.mxu0 0
    %269 = vmatprep.subr.bf16.mxu0 0
    %270 = vmatpush1.bf16.msra.mxu0 0
    %271 = vmatprep.subr.bf16.mxu0 0
    %272 = vmatpush1.bf16.msra.mxu0 0
    %273 = vmatprep.subr.bf16.mxu0 0
    %274 = vmatpush1.bf16.msra.mxu0 0
    %275 = vmatprep.subr.bf16.mxu0 0
    %276 = vmatpush1.bf16.msra.mxu0 0
    %277 = vmatprep.mubr.bf16.mxu0 0
    %278 = vmatmul.mubr.bf16.gmra.mrb[0].mxu0 %v243
    %v279 = vpop.f32.mrb[0].mxu0
    %v280 = vadd.f32 %v59, %v279
    %v281 = vpop.f32.mrb[0].mxu0
    %v282 = vpop.f32.mrb[0].mxu0
    %v283 = vpop.f32.mrb[0].mxu0
    %284 = vdwg.mxu0
    %v285 = vadd.f32 %v237, %v280
    %v286 = vxor.u32 %v285, 2147483648
    %v287 = vmul.f32 %v286, 1.442695
    %v288 = vpow.pop %v287
    %v289 = vadd.f32 %v288, 1.0
    %v290 = vrcp.pop %v289
    %v291 = vmul.f32 1.0, %v290
    %293 = vrot.lane.b32.xlu0 %v280, 64
    %v294 = vpop.permute.xlu0 %293
    %v296 = vmul.f32 %v291, %v294
    %298 = vrot.lane.b32.xlu0 %v296, 64
    %v299 = vpop.permute.xlu0 %298
    %v301 = vadd.f32 %v237, %v299
    %v302 = vtanh.pop %v301
    %v303 = vsub.f32 1.0, %v291
    %305 = vrot.lane.b32.xlu0 %v302, 96
    %v306 = vpop.permute.xlu0 %305
    %v308 = vmul.f32 %v303, %v306
    %v309 = vmul.f32 %v291, %v229
    %v310 = vadd.f32 %v308, %v309
    %312 = vrot.lane.b32.xlu0 %v310, 96
    %v313 = vpop.permute.xlu0 %312
    %s315 = scalar_lea.vmem [#allocation8], 16
    %316 = vst.msk [vmem:[%s315] sm:$0xff] %vm76, %v313
    %s317 = scalar_lea.vmem [#allocation3], 24
    %v318 = vld [vmem:[%s317] sm:$0xff]
    %v319 = vpack.c.bf16 %v310, %v310
    %321 = vrot.lane.b32.xlu0 %v319, 96
    %v322 = vpop.permute.xlu0 %321
    %v324 = vsel %vm76, %v322, 0
    %326 = vmatprep.subr.bf16.mxu0 0
    %327 = vmatpush1.bf16.msra.mxu0 %v72
    %328 = vmatprep.subr.bf16.mxu0 0
    %329 = vmatpush1.bf16.msra.mxu0 %v73
    %330 = vmatprep.subr.bf16.mxu0 0
    %331 = vmatpush1.bf16.msra.mxu0 0
    %332 = vmatprep.subr.bf16.mxu0 0
    %333 = vmatpush1.bf16.msra.mxu0 0
    %334 = vmatprep.subr.bf16.mxu0 0
    %335 = vmatpush1.bf16.msra.mxu0 0
    %336 = vmatprep.subr.bf16.mxu0 0
    %337 = vmatpush1.bf16.msra.mxu0 0
    %338 = vmatprep.subr.bf16.mxu0 0
    %339 = vmatpush1.bf16.msra.mxu0 0
    %340 = vmatprep.subr.bf16.mxu0 0
    %341 = vmatpush1.bf16.msra.mxu0 0
    %342 = vmatprep.subr.bf16.mxu0 0
    %343 = vmatpush1.bf16.msra.mxu0 0
    %344 = vmatprep.subr.bf16.mxu0 0
    %345 = vmatpush1.bf16.msra.mxu0 0
    %346 = vmatprep.subr.bf16.mxu0 0
    %347 = vmatpush1.bf16.msra.mxu0 0
    %348 = vmatprep.subr.bf16.mxu0 0
    %349 = vmatpush1.bf16.msra.mxu0 0
    %350 = vmatprep.subr.bf16.mxu0 0
    %351 = vmatpush1.bf16.msra.mxu0 0
    %352 = vmatprep.subr.bf16.mxu0 0
    %353 = vmatpush1.bf16.msra.mxu0 0
    %354 = vmatprep.subr.bf16.mxu0 0
    %355 = vmatpush1.bf16.msra.mxu0 0
    %356 = vmatprep.subr.bf16.mxu0 0
    %357 = vmatpush1.bf16.msra.mxu0 0
    %358 = vmatprep.mubr.bf16.mxu0 0
    %359 = vmatmul.mubr.bf16.gmra.mrb[0].mxu0 %v324
    %v360 = vpop.f32.mrb[0].mxu0
    %v361 = vadd.f32 %v59, %v360
    %v362 = vpop.f32.mrb[0].mxu0
    %v363 = vpop.f32.mrb[0].mxu0
    %v364 = vpop.f32.mrb[0].mxu0
    %365 = vdwg.mxu0
    %v366 = vadd.f32 %v318, %v361
    %v367 = vxor.u32 %v366, 2147483648
    %v368 = vmul.f32 %v367, 1.442695
    %v369 = vpow.pop %v368
    %v370 = vadd.f32 %v369, 1.0
    %v371 = vrcp.pop %v370
    %v372 = vmul.f32 1.0, %v371
    %374 = vrot.lane.b32.xlu0 %v361, 64
    %v375 = vpop.permute.xlu0 %374
    %v377 = vmul.f32 %v372, %v375
    %379 = vrot.lane.b32.xlu0 %v377, 64
    %v380 = vpop.permute.xlu0 %379
    %v382 = vadd.f32 %v318, %v380
    %v383 = vtanh.pop %v382
    %v384 = vsub.f32 1.0, %v372
    %386 = vrot.lane.b32.xlu0 %v383, 96
    %v387 = vpop.permute.xlu0 %386
    %v389 = vmul.f32 %v384, %v387
    %v390 = vmul.f32 %v372, %v310
    %v391 = vadd.f32 %v389, %v390
    %393 = vrot.lane.b32.xlu0 %v391, 96
    %v394 = vpop.permute.xlu0 %393
    %s396 = scalar_lea.vmem [#allocation8], 24
    %397 = vst.msk [vmem:[%s396] sm:$0xff] %vm76, %v394
    %s398 = scalar_lea.vmem [#allocation3], 32
    %v399 = vld [vmem:[%s398] sm:$0xff]
    %v400 = vpack.c.bf16 %v391, %v391
    %402 = vrot.lane.b32.xlu0 %v400, 96
    %v403 = vpop.permute.xlu0 %402
    %v405 = vsel %vm76, %v403, 0
    %407 = vmatprep.subr.bf16.mxu0 0
    %408 = vmatpush1.bf16.msra.mxu0 %v72
    %409 = vmatprep.subr.bf16.mxu0 0
    %410 = vmatpush1.bf16.msra.mxu0 %v73
    %411 = vmatprep.subr.bf16.mxu0 0
    %412 = vmatpush1.bf16.msra.mxu0 0
    %413 = vmatprep.subr.bf16.mxu0 0
    %414 = vmatpush1.bf16.msra.mxu0 0
    %415 = vmatprep.subr.bf16.mxu0 0
    %416 = vmatpush1.bf16.msra.mxu0 0
    %417 = vmatprep.subr.bf16.mxu0 0
    %418 = vmatpush1.bf16.msra.mxu0 0
    %419 = vmatprep.subr.bf16.mxu0 0
    %420 = vmatpush1.bf16.msra.mxu0 0
    %421 = vmatprep.subr.bf16.mxu0 0
    %422 = vmatpush1.bf16.msra.mxu0 0
    %423 = vmatprep.subr.bf16.mxu0 0
    %424 = vmatpush1.bf16.msra.mxu0 0
    %425 = vmatprep.subr.bf16.mxu0 0
    %426 = vmatpush1.bf16.msra.mxu0 0
    %427 = vmatprep.subr.bf16.mxu0 0
    %428 = vmatpush1.bf16.msra.mxu0 0
    %429 = vmatprep.subr.bf16.mxu0 0
    %430 = vmatpush1.bf16.msra.mxu0 0
    %431 = vmatprep.subr.bf16.mxu0 0
    %432 = vmatpush1.bf16.msra.mxu0 0
    %433 = vmatprep.subr.bf16.mxu0 0
    %434 = vmatpush1.bf16.msra.mxu0 0
    %435 = vmatprep.subr.bf16.mxu0 0
    %436 = vmatpush1.bf16.msra.mxu0 0
    %437 = vmatprep.subr.bf16.mxu0 0
    %438 = vmatpush1.bf16.msra.mxu0 0
    %439 = vmatprep.mubr.bf16.mxu0 0
    %440 = vmatmul.mubr.bf16.gmra.mrb[0].mxu0 %v405
    %v441 = vpop.f32.mrb[0].mxu0
    %v442 = vadd.f32 %v59, %v441
    %v443 = vpop.f32.mrb[0].mxu0
    %v444 = vpop.f32.mrb[0].mxu0
    %v445 = vpop.f32.mrb[0].mxu0
    %446 = vdwg.mxu0
    %v447 = vadd.f32 %v399, %v442
    %v448 = vxor.u32 %v447, 2147483648
    %v449 = vmul.f32 %v448, 1.442695
    %v450 = vpow.pop %v449
    %v451 = vadd.f32 %v450, 1.0
    %v452 = vrcp.pop %v451
    %v453 = vmul.f32 1.0, %v452
    %455 = vrot.lane.b32.xlu0 %v442, 64
    %v456 = vpop.permute.xlu0 %455
    %v458 = vmul.f32 %v453, %v456
    %460 = vrot.lane.b32.xlu0 %v458, 64
    %v461 = vpop.permute.xlu0 %460
    %v463 = vadd.f32 %v399, %v461
    %v464 = vtanh.pop %v463
    %v465 = vsub.f32 1.0, %v453
    %467 = vrot.lane.b32.xlu0 %v464, 96
    %v468 = vpop.permute.xlu0 %467
    %v470 = vmul.f32 %v465, %v468
    %v471 = vmul.f32 %v453, %v391
    %v472 = vadd.f32 %v470, %v471
    %474 = vrot.lane.b32.xlu0 %v472, 96
    %v475 = vpop.permute.xlu0 %474
    %s477 = scalar_lea.vmem [#allocation8], 32
    %478 = vst.msk [vmem:[%s477] sm:$0xff] %vm76, %v475
    %s479 = scalar_lea.vmem [#allocation3], 40
    %v480 = vld [vmem:[%s479] sm:$0xff]
    %v481 = vpack.c.bf16 %v472, %v472
    %483 = vrot.lane.b32.xlu0 %v481, 96
    %v484 = vpop.permute.xlu0 %483
    %v486 = vsel %vm76, %v484, 0
    %488 = vmatprep.subr.bf16.mxu0 0
    %489 = vmatpush1.bf16.msra.mxu0 %v72
    %490 = vmatprep.subr.bf16.mxu0 0
    %491 = vmatpush1.bf16.msra.mxu0 %v73
    %492 = vmatprep.subr.bf16.mxu0 0
    %493 = vmatpush1.bf16.msra.mxu0 0
    %494 = vmatprep.subr.bf16.mxu0 0
    %495 = vmatpush1.bf16.msra.mxu0 0
    %496 = vmatprep.subr.bf16.mxu0 0
    %497 = vmatpush1.bf16.msra.mxu0 0
    %498 = vmatprep.subr.bf16.mxu0 0
    %499 = vmatpush1.bf16.msra.mxu0 0
    %500 = vmatprep.subr.bf16.mxu0 0
    %501 = vmatpush1.bf16.msra.mxu0 0
    %502 = vmatprep.subr.bf16.mxu0 0
    %503 = vmatpush1.bf16.msra.mxu0 0
    %504 = vmatprep.subr.bf16.mxu0 0
    %505 = vmatpush1.bf16.msra.mxu0 0
    %506 = vmatprep.subr.bf16.mxu0 0
    %507 = vmatpush1.bf16.msra.mxu0 0
    %508 = vmatprep.subr.bf16.mxu0 0
    %509 = vmatpush1.bf16.msra.mxu0 0
    %510 = vmatprep.subr.bf16.mxu0 0
    %511 = vmatpush1.bf16.msra.mxu0 0
    %512 = vmatprep.subr.bf16.mxu0 0
    %513 = vmatpush1.bf16.msra.mxu0 0
    %514 = vmatprep.subr.bf16.mxu0 0
    %515 = vmatpush1.bf16.msra.mxu0 0
    %516 = vmatprep.subr.bf16.mxu0 0
    %517 = vmatpush1.bf16.msra.mxu0 0
    %518 = vmatprep.subr.bf16.mxu0 0
    %519 = vmatpush1.bf16.msra.mxu0 0
    %520 = vmatprep.mubr.bf16.mxu0 0
    %521 = vmatmul.mubr.bf16.gmra.mrb[0].mxu0 %v486
    %v522 = vpop.f32.mrb[0].mxu0
    %v523 = vadd.f32 %v59, %v522
    %v524 = vpop.f32.mrb[0].mxu0
    %v525 = vpop.f32.mrb[0].mxu0
    %v526 = vpop.f32.mrb[0].mxu0
    %527 = vdwg.mxu0
    %v528 = vadd.f32 %v480, %v523
    %v529 = vxor.u32 %v528, 2147483648
    %v530 = vmul.f32 %v529, 1.442695
    %v531 = vpow.pop %v530
    %v532 = vadd.f32 %v531, 1.0
    %v533 = vrcp.pop %v532
    %v534 = vmul.f32 1.0, %v533
    %536 = vrot.lane.b32.xlu0 %v523, 64
    %v537 = vpop.permute.xlu0 %536
    %v539 = vmul.f32 %v534, %v537
    %541 = vrot.lane.b32.xlu0 %v539, 64
    %v542 = vpop.permute.xlu0 %541
    %v544 = vadd.f32 %v480, %v542
    %v545 = vtanh.pop %v544
    %v546 = vsub.f32 1.0, %v534
    %548 = vrot.lane.b32.xlu0 %v545, 96
    %v549 = vpop.permute.xlu0 %548
    %v551 = vmul.f32 %v546, %v549
    %v552 = vmul.f32 %v534, %v472
    %v553 = vadd.f32 %v551, %v552
    %555 = vrot.lane.b32.xlu0 %v553, 96
    %v556 = vpop.permute.xlu0 %555
    %s558 = scalar_lea.vmem [#allocation8], 40
    %559 = vst.msk [vmem:[%s558] sm:$0xff] %vm76, %v556
    %s560 = scalar_lea.vmem [#allocation3], 48
    %v561 = vld [vmem:[%s560] sm:$0xff]
    %v562 = vpack.c.bf16 %v553, %v553
    %564 = vrot.lane.b32.xlu0 %v562, 96
    %v565 = vpop.permute.xlu0 %564
    %v567 = vsel %vm76, %v565, 0
    %569 = vmatprep.subr.bf16.mxu0 0
    %570 = vmatpush1.bf16.msra.mxu0 %v72
    %571 = vmatprep.subr.bf16.mxu0 0
    %572 = vmatpush1.bf16.msra.mxu0 %v73
    %573 = vmatprep.subr.bf16.mxu0 0
    %574 = vmatpush1.bf16.msra.mxu0 0
    %575 = vmatprep.subr.bf16.mxu0 0
    %576 = vmatpush1.bf16.msra.mxu0 0
    %577 = vmatprep.subr.bf16.mxu0 0
    %578 = vmatpush1.bf16.msra.mxu0 0
    %579 = vmatprep.subr.bf16.mxu0 0
    %580 = vmatpush1.bf16.msra.mxu0 0
    %581 = vmatprep.subr.bf16.mxu0 0
    %582 = vmatpush1.bf16.msra.mxu0 0
    %583 = vmatprep.subr.bf16.mxu0 0
    %584 = vmatpush1.bf16.msra.mxu0 0
    %585 = vmatprep.subr.bf16.mxu0 0
    %586 = vmatpush1.bf16.msra.mxu0 0
    %587 = vmatprep.subr.bf16.mxu0 0
    %588 = vmatpush1.bf16.msra.mxu0 0
    %589 = vmatprep.subr.bf16.mxu0 0
    %590 = vmatpush1.bf16.msra.mxu0 0
    %591 = vmatprep.subr.bf16.mxu0 0
    %592 = vmatpush1.bf16.msra.mxu0 0
    %593 = vmatprep.subr.bf16.mxu0 0
    %594 = vmatpush1.bf16.msra.mxu0 0
    %595 = vmatprep.subr.bf16.mxu0 0
    %596 = vmatpush1.bf16.msra.mxu0 0
    %597 = vmatprep.subr.bf16.mxu0 0
    %598 = vmatpush1.bf16.msra.mxu0 0
    %599 = vmatprep.subr.bf16.mxu0 0
    %600 = vmatpush1.bf16.msra.mxu0 0
    %601 = vmatprep.mubr.bf16.mxu0 0
    %602 = vmatmul.mubr.bf16.gmra.mrb[0].mxu0 %v567
    %v603 = vpop.f32.mrb[0].mxu0
    %v604 = vadd.f32 %v59, %v603
    %v605 = vpop.f32.mrb[0].mxu0
    %v606 = vpop.f32.mrb[0].mxu0
    %v607 = vpop.f32.mrb[0].mxu0
    %608 = vdwg.mxu0
    %v609 = vadd.f32 %v561, %v604
    %v610 = vxor.u32 %v609, 2147483648
    %v611 = vmul.f32 %v610, 1.442695
    %v612 = vpow.pop %v611
    %v613 = vadd.f32 %v612, 1.0
    %v614 = vrcp.pop %v613
    %v615 = vmul.f32 1.0, %v614
    %617 = vrot.lane.b32.xlu0 %v604, 64
    %v618 = vpop.permute.xlu0 %617
    %v620 = vmul.f32 %v615, %v618
    %622 = vrot.lane.b32.xlu0 %v620, 64
    %v623 = vpop.permute.xlu0 %622
    %v625 = vadd.f32 %v561, %v623
    %v626 = vtanh.pop %v625
    %v627 = vsub.f32 1.0, %v615
    %629 = vrot.lane.b32.xlu0 %v626, 96
    %v630 = vpop.permute.xlu0 %629
    %v632 = vmul.f32 %v627, %v630
    %v633 = vmul.f32 %v615, %v553
    %v634 = vadd.f32 %v632, %v633
    %636 = vrot.lane.b32.xlu0 %v634, 96
    %v637 = vpop.permute.xlu0 %636
    %s639 = scalar_lea.vmem [#allocation8], 48
    %640 = vst.msk [vmem:[%s639] sm:$0xff] %vm76, %v637
    %s641 = scalar_lea.vmem [#allocation3], 56
    %v642 = vld [vmem:[%s641] sm:$0xff]
    %v643 = vpack.c.bf16 %v634, %v634
    %645 = vrot.lane.b32.xlu0 %v643, 96
    %v646 = vpop.permute.xlu0 %645
    %v648 = vsel %vm76, %v646, 0
    %650 = vmatprep.subr.bf16.mxu0 0
    %651 = vmatpush1.bf16.msra.mxu0 %v72
    %652 = vmatprep.subr.bf16.mxu0 0
    %653 = vmatpush1.bf16.msra.mxu0 %v73
    %654 = vmatprep.subr.bf16.mxu0 0
    %655 = vmatpush1.bf16.msra.mxu0 0
    %656 = vmatprep.subr.bf16.mxu0 0
    %657 = vmatpush1.bf16.msra.mxu0 0
    %658 = vmatprep.subr.bf16.mxu0 0
    %659 = vmatpush1.bf16.msra.mxu0 0
    %660 = vmatprep.subr.bf16.mxu0 0
    %661 = vmatpush1.bf16.msra.mxu0 0
    %662 = vmatprep.subr.bf16.mxu0 0
    %663 = vmatpush1.bf16.msra.mxu0 0
    %664 = vmatprep.subr.bf16.mxu0 0
    %665 = vmatpush1.bf16.msra.mxu0 0
    %666 = vmatprep.subr.bf16.mxu0 0
    %667 = vmatpush1.bf16.msra.mxu0 0
    %668 = vmatprep.subr.bf16.mxu0 0
    %669 = vmatpush1.bf16.msra.mxu0 0
    %670 = vmatprep.subr.bf16.mxu0 0
    %671 = vmatpush1.bf16.msra.mxu0 0
    %672 = vmatprep.subr.bf16.mxu0 0
    %673 = vmatpush1.bf16.msra.mxu0 0
    %674 = vmatprep.subr.bf16.mxu0 0
    %675 = vmatpush1.bf16.msra.mxu0 0
    %676 = vmatprep.subr.bf16.mxu0 0
    %677 = vmatpush1.bf16.msra.mxu0 0
    %678 = vmatprep.subr.bf16.mxu0 0
    %679 = vmatpush1.bf16.msra.mxu0 0
    %680 = vmatprep.subr.bf16.mxu0 0
    %681 = vmatpush1.bf16.msra.mxu0 0
    %682 = vmatprep.mubr.bf16.mxu0 0
    %683 = vmatmul.mubr.bf16.gmra.mrb[0].mxu0 %v648
    %v684 = vpop.f32.mrb[0].mxu0
    %v685 = vadd.f32 %v59, %v684
    %v686 = vpop.f32.mrb[0].mxu0
    %v687 = vpop.f32.mrb[0].mxu0
    %v688 = vpop.f32.mrb[0].mxu0
    %689 = vdwg.mxu0
    %v690 = vadd.f32 %v642, %v685
    %v691 = vxor.u32 %v690, 2147483648
    %v692 = vmul.f32 %v691, 1.442695
    %v693 = vpow.pop %v692
    %v694 = vadd.f32 %v693, 1.0
    %v695 = vrcp.pop %v694
    %v696 = vmul.f32 1.0, %v695
    %698 = vrot.lane.b32.xlu0 %v685, 64
    %v699 = vpop.permute.xlu0 %698
    %v701 = vmul.f32 %v696, %v699
    %703 = vrot.lane.b32.xlu0 %v701, 64
    %v704 = vpop.permute.xlu0 %703
    %v706 = vadd.f32 %v642, %v704
    %v707 = vtanh.pop %v706
    %v708 = vsub.f32 1.0, %v696
    %710 = vrot.lane.b32.xlu0 %v707, 96
    %v711 = vpop.permute.xlu0 %710
    %v713 = vmul.f32 %v708, %v711
    %v714 = vmul.f32 %v696, %v634
    %v715 = vadd.f32 %v713, %v714
    %717 = vrot.lane.b32.xlu0 %v715, 96
    %v718 = vpop.permute.xlu0 %717
    %s720 = scalar_lea.vmem [#allocation8], 56
    %721 = vst.msk [vmem:[%s720] sm:$0xff] %vm76, %v718
    %722 = vst.msk [vmem:[#allocation2] sm:$0xff] %vm76, %v718
    // Predicated region
    $region26: #{tpu_custom_call.1} parent=1 // pred_check
      _
    $region27: #{tpu_custom_call.1} parent=1 // pred_check_branch
      %724 = sbr.rel (0) target = $region29
    $region28: #{tpu_custom_call.1} parent=1 // pred_region
      %s726 = ssub.s32 1024, 1024
      %727 = vsyncadd [#allocation5], %s726
      %s728 = sshll.u32 [#allocation8], 4
      %s729 = int_to_ptr.vmem [resolvable:$true] %s728
      %734 = dma.vmem_to_hbm [thread:$0]  %s729, 1024, %s3, [#allocation5], 128, 128, 8
    $region29: #{tpu_custom_call.1} parent=1 // pred_fallthru
      _
    // Predicated region
    $region30: #{tpu_custom_call.1} parent=1 // pred_check
      _
    $region31: #{tpu_custom_call.1} parent=1 // pred_check_branch
      %736 = sbr.rel (0) target = $region33
    $region32: #{tpu_custom_call.1} parent=1 // pred_region
      %737 = dma.done [#allocation5], 1024
    $region33: #{tpu_custom_call.1} parent=1 // pred_fallthru
      _
    %738 = vsyncpa [#allocation4], 1
    %739 = vsyncpa [#allocation7], 1
    %740 = vsyncpa [#allocation5], 1

// kernel: tpu_custom_call.1
$region0: #{tpu_custom_call.1}
  #allocation0 [shape = 'u32[]', space=smem, size = 0x4, offset = 0x4, fixed_abs, tag = 'smem constant byte address 0x4 - core index']
  #allocation1 [shape = 'u32[144,128]{1,0:T(1,128)}', space=vmem, size = 0x12000, scoped, tag = 'internal scratch']
  #allocation2 [shape = 'f32[8,32]{1,0:T(8,128)}', space=vmem, size = 0x1000, scoped, tag = 'scratch operand']
  %s0 = inlined_call_operand.hbm [shape: f32[8,8,96], index: 0, kind: input, shape index: {}]
  %s1 = inlined_call_operand.hbm [shape: bf16[32,96], index: 1, kind: input, shape index: {}]
  %s2 = inlined_call_operand.vmem [shape: f32[1,96], index: 2, kind: input, shape index: {}]
  %s3 = inlined_call_operand.hbm [shape: f32[8,8,32], index: 3, kind: output, shape index: {}]
  %s4 = sld [smem:[#allocation0]]
  $region34: #{tpu_custom_call.1} parent=0
    _
  %s6 = ssub.s32 1, %s4
  %s7 = scalar_select 0, %s6, %s4
  $region1: #{tpu_custom_call.1} parent=0
    #allocation3 [shape = 'u8[32768]{0}', space=vmem, size = 0x8000, scoped, tag = 'input window, operand 0, single buffered']
    #allocation4 [shape = 's32[1]{0}', space=sflag, size = 0x4, scoped, tag = 'scoped memory for tpu_custom_call.1']
    #allocation5 [shape = 's32[1]{0}', space=sflag, size = 0x4, scoped, tag = 'scoped memory for tpu_custom_call.1']
    #allocation6 [shape = 'u8[8192]{0}', space=vmem, size = 0x2000, scoped, tag = 'input window, operand 1, single buffered']
    #allocation7 [shape = 's32[1]{0}', space=sflag, size = 0x4, scoped, tag = 'scoped memory for tpu_custom_call.1']
    #allocation8 [shape = 'u8[32768]{0}', space=vmem, size = 0x8000, scoped, tag = 'output window, operand 0, single buffered']
    %8 = vsyncpa [#allocation4], 0
    %9 = vsyncpa [#allocation7], 0
    %10 = vsyncpa [#allocation5], 0
    // Predicated region
    $region2: #{tpu_custom_call.1} parent=1 // pred_check
      _
    $region3: #{tpu_custom_call.1} parent=1 // pred_check_branch
      %12 = sbr.rel (0) target = $region5
    $region4: #{tpu_custom_call.1} parent=1 // pred_region
      %s14 = ssub.s32 1024, 1024
      %15 = vsyncadd [#allocation4], %s14
      %s16 = sshll.u32 [#allocation3], 4
      %s17 = int_to_ptr.vmem [resolvable:$true] %s16
      %22 = dma.hbm_to_vmem [thread:$0]  %s0, 1024, %s17, [#allocation4], 128, 128, 8
    $region5: #{tpu_custom_call.1} parent=1 // pred_fallthru
      _
    // Predicated region
    $region6: #{tpu_custom_call.1} parent=1 // pred_check
      _
    $region7: #{tpu_custom_call.1} parent=1 // pred_check_branch
      %24 = sbr.rel (0) target = $region9
    $region8: #{tpu_custom_call.1} parent=1 // pred_region
      %s26 = ssub.s32 256, 256
      %27 = vsyncadd [#allocation7], %s26
      %s28 = sshll.u32 [#allocation6], 4
      %s29 = int_to_ptr.vmem [resolvable:$true] %s28
      %34 = dma.hbm_to_vmem [thread:$0]  %s1, 256, %s29, [#allocation7], 64, 64, 4
    $region9: #{tpu_custom_call.1} parent=1 // pred_fallthru
      _
    // Predicated region
    $region10: #{tpu_custom_call.1} parent=1 // pred_check
      _
    $region11: #{tpu_custom_call.1} parent=1 // pred_check_branch
      %36 = sbr.rel (0) target = $region13
    $region12: #{tpu_custom_call.1} parent=1 // pred_region
      _
    $region13: #{tpu_custom_call.1} parent=1 // pred_fallthru
      _
    // Predicated region
    $region14: #{tpu_custom_call.1} parent=1 // pred_check
      _
    $region15: #{tpu_custom_call.1} parent=1 // pred_check_branch
      %38 = sbr.rel (0) target = $region17
    $region16: #{tpu_custom_call.1} parent=1 // pred_region
      %39 = dma.done [#allocation4], 1024
    $region17: #{tpu_custom_call.1} parent=1 // pred_fallthru
      _
    // Predicated region
    $region18: #{tpu_custom_call.1} parent=1 // pred_check
      _
    $region19: #{tpu_custom_call.1} parent=1 // pred_check_branch
      %41 = sbr.rel (0) target = $region21
    $region20: #{tpu_custom_call.1} parent=1 // pred_region
      %42 = dma.done [#allocation7], 256
    $region21: #{tpu_custom_call.1} parent=1 // pred_fallthru
      _
    %p44 = scmp.eq.s32.totalorder 0, 0
    // Predicated region
    $region22: #{tpu_custom_call.1} parent=1 // pred_check
      %p45 = pneg %p44
    $region23: #{tpu_custom_call.1} parent=1 // pred_check_branch
      %47 = sbr.rel (%p45) target = $region25
    $region24: #{tpu_custom_call.1} parent=1 // pred_region
      %vm48 = vcmask 261120
      %49 = vst.msk [vmem:[#allocation2] sm:$0xff] %vm48, 0.0
    $region25: #{tpu_custom_call.1} parent=1 // pred_fallthru
      _
    %v50 = vld [vmem:[#allocation6] sm:$0xf]
    %v51 = vld [vmem:[#allocation6 + $0x4] sm:$0xf]
    %v52 = vld [vmem:[#allocation6 + $0x8] sm:$0xf]
    %v53 = vld [vmem:[#allocation6 + $0xc] sm:$0xf]
    %v54 = vld [vmem:[%s2] sm:$0x1]
    %v56 = vlaneseq
    %v57 = vshrl.u32 %v56, 7
    %v58 = vsub.s32 0, %v57
    %v59 = vrot.slane %v54, %v58
    %v61 = vld [vmem:[#allocation2] sm:$0xff]
    %v62 = vld [vmem:[#allocation3] sm:$0xff]
    %v63 = vpack.c.bf16 %v61, %v61
    %v68 = vunpack.c.l.b16 %v50
    %v69 = vunpack.c.l.b16 %v51
    %v70 = vunpack.c.l.b16 %v52
    %v71 = vunpack.c.l.b16 %v53
    %v72 = vpack.c.b16 %v69, %v68
    %v73 = vpack.c.b16 %v71, %v70
    %vm76 = vcmask 261120
    %v78 = vsel %vm76, %v63, 0
    %80 = vmatprep.subr.bf16.mxu0 0
    %81 = vmatpush1.bf16.msra.mxu0 %v72
    %82 = vmatprep.subr.bf16.mxu0 0
    %83 = vmatpush1.bf16.msra.mxu0 %v73
    %84 = vmatprep.subr.bf16.mxu0 0
    %85 = vmatpush1.bf16.msra.mxu0 0
    %86 = vmatprep.subr.bf16.mxu0 0
    %87 = vmatpush1.bf16.msra.mxu0 0
    %88 = vmatprep.subr.bf16.mxu0 0
    %89 = vmatpush1.bf16.msra.mxu0 0
    %90 = vmatprep.subr.bf16.mxu0 0
    %91 = vmatpush1.bf16.msra.mxu0 0
    %92 = vmatprep.subr.bf16.mxu0 0
    %93 = vmatpush1.bf16.msra.mxu0 0
    %94 = vmatprep.subr.bf16.mxu0 0
    %95 = vmatpush1.bf16.msra.mxu0 0
    %96 = vmatprep.subr.bf16.mxu0 0
    %97 = vmatpush1.bf16.msra.mxu0 0
    %98 = vmatprep.subr.bf16.mxu0 0
    %99 = vmatpush1.bf16.msra.mxu0 0
    %100 = vmatprep.subr.bf16.mxu0 0
    %101 = vmatpush1.bf16.msra.mxu0 0
    %102 = vmatprep.subr.bf16.mxu0 0
    %103 = vmatpush1.bf16.msra.mxu0 0
    %104 = vmatprep.subr.bf16.mxu0 0
    %105 = vmatpush1.bf16.msra.mxu0 0
    %106 = vmatprep.subr.bf16.mxu0 0
    %107 = vmatpush1.bf16.msra.mxu0 0
    %108 = vmatprep.subr.bf16.mxu0 0
    %109 = vmatpush1.bf16.msra.mxu0 0
    %110 = vmatprep.subr.bf16.mxu0 0
    %111 = vmatpush1.bf16.msra.mxu0 0
    %112 = vmatprep.mubr.bf16.mxu0 0
    %113 = vmatmul.mubr.bf16.gmra.mrb[0].mxu0 %v78
    %v114 = vpop.f32.mrb[0].mxu0
    %v115 = vadd.f32 %v59, %v114
    %v116 = vpop.f32.mrb[0].mxu0
    %v117 = vpop.f32.mrb[0].mxu0
    %v118 = vpop.f32.mrb[0].mxu0
    %119 = vdwg.mxu0
    %v120 = vadd.f32 %v62, %v115
    %v121 = vxor.u32 %v120, 2147483648
    %v122 = vmul.f32 %v121, 1.442695
    %v123 = vpow.pop %v122
    %v124 = vadd.f32 %v123, 1.0
    %v125 = vrcp.pop %v124
    %v126 = vmul.f32 1.0, %v125
    %128 = vrot.lane.b32.xlu0 %v115, 64
    %v129 = vpop.permute.xlu0 %128
    %v131 = vmul.f32 %v126, %v129
    %133 = vrot.lane.b32.xlu0 %v131, 64
    %v134 = vpop.permute.xlu0 %133
    %v136 = vadd.f32 %v62, %v134
    %v137 = vtanh.pop %v136
    %v138 = vsub.f32 1.0, %v126
    %140 = vrot.lane.b32.xlu0 %v137, 96
    %v141 = vpop.permute.xlu0 %140
    %v143 = vmul.f32 %v138, %v141
    %145 = vrot.lane.b32.xlu0 %v61, 32
    %v146 = vpop.permute.xlu0 %145
    %v148 = vmul.f32 %v126, %v146
    %v149 = vadd.f32 %v143, %v148
    %151 = vrot.lane.b32.xlu0 %v149, 96
    %v152 = vpop.permute.xlu0 %151
    %154 = vst.msk [vmem:[#allocation8] sm:$0xff] %vm76, %v152
    %s155 = scalar_lea.vmem [#allocation3], 8
    %v156 = vld [vmem:[%s155] sm:$0xff]
    %v157 = vpack.c.bf16 %v149, %v149
    %159 = vrot.lane.b32.xlu0 %v157, 96
    %v160 = vpop.permute.xlu0 %159
    %v162 = vsel %vm76, %v160, 0
    %164 = vmatprep.subr.bf16.mxu0 0
    %165 = vmatpush1.bf16.msra.mxu0 %v72
    %166 = vmatprep.subr.bf16.mxu0 0
    %167 = vmatpush1.bf16.msra.mxu0 %v73
    %168 = vmatprep.subr.bf16.mxu0 0
    %169 = vmatpush1.bf16.msra.mxu0 0
    %170 = vmatprep.subr.bf16.mxu0 0
    %171 = vmatpush1.bf16.msra.mxu0 0
    %172 = vmatprep.subr.bf16.mxu0 0
    %173 = vmatpush1.bf16.msra.mxu0 0
    %174 = vmatprep.subr.bf16.mxu0 0
    %175 = vmatpush1.bf16.msra.mxu0 0
    %176 = vmatprep.subr.bf16.mxu0 0
    %177 = vmatpush1.bf16.msra.mxu0 0
    %178 = vmatprep.subr.bf16.mxu0 0
    %179 = vmatpush1.bf16.msra.mxu0 0
    %180 = vmatprep.subr.bf16.mxu0 0
    %181 = vmatpush1.bf16.msra.mxu0 0
    %182 = vmatprep.subr.bf16.mxu0 0
    %183 = vmatpush1.bf16.msra.mxu0 0
    %184 = vmatprep.subr.bf16.mxu0 0
    %185 = vmatpush1.bf16.msra.mxu0 0
    %186 = vmatprep.subr.bf16.mxu0 0
    %187 = vmatpush1.bf16.msra.mxu0 0
    %188 = vmatprep.subr.bf16.mxu0 0
    %189 = vmatpush1.bf16.msra.mxu0 0
    %190 = vmatprep.subr.bf16.mxu0 0
    %191 = vmatpush1.bf16.msra.mxu0 0
    %192 = vmatprep.subr.bf16.mxu0 0
    %193 = vmatpush1.bf16.msra.mxu0 0
    %194 = vmatprep.subr.bf16.mxu0 0
    %195 = vmatpush1.bf16.msra.mxu0 0
    %196 = vmatprep.mubr.bf16.mxu0 0
    %197 = vmatmul.mubr.bf16.gmra.mrb[0].mxu0 %v162
    %v198 = vpop.f32.mrb[0].mxu0
    %v199 = vadd.f32 %v59, %v198
    %v200 = vpop.f32.mrb[0].mxu0
    %v201 = vpop.f32.mrb[0].mxu0
    %v202 = vpop.f32.mrb[0].mxu0
    %203 = vdwg.mxu0
    %v204 = vadd.f32 %v156, %v199
    %v205 = vxor.u32 %v204, 2147483648
    %v206 = vmul.f32 %v205, 1.442695
    %v207 = vpow.pop %v206
    %v208 = vadd.f32 %v207, 1.0
    %v209 = vrcp.pop %v208
    %v210 = vmul.f32 1.0, %v209
    %212 = vrot.lane.b32.xlu0 %v199, 64
    %v213 = vpop.permute.xlu0 %212
    %v215 = vmul.f32 %v210, %v213
    %217 = vrot.lane.b32.xlu0 %v215, 64
    %v218 = vpop.permute.xlu0 %217
    %v220 = vadd.f32 %v156, %v218
    %v221 = vtanh.pop %v220
    %v222 = vsub.f32 1.0, %v210
    %224 = vrot.lane.b32.xlu0 %v221, 96
    %v225 = vpop.permute.xlu0 %224
    %v227 = vmul.f32 %v222, %v225
    %v228 = vmul.f32 %v210, %v149
    %v229 = vadd.f32 %v227, %v228
    %231 = vrot.lane.b32.xlu0 %v229, 96
    %v232 = vpop.permute.xlu0 %231
    %s234 = scalar_lea.vmem [#allocation8], 8
    %235 = vst.msk [vmem:[%s234] sm:$0xff] %vm76, %v232
    %s236 = scalar_lea.vmem [#allocation3], 16
    %v237 = vld [vmem:[%s236] sm:$0xff]
    %v238 = vpack.c.bf16 %v229, %v229
    %240 = vrot.lane.b32.xlu0 %v238, 96
    %v241 = vpop.permute.xlu0 %240
    %v243 = vsel %vm76, %v241, 0
    %245 = vmatprep.subr.bf16.mxu0 0
    %246 = vmatpush1.bf16.msra.mxu0 %v72
    %247 = vmatprep.subr.bf16.mxu0 0
    %248 = vmatpush1.bf16.msra.mxu0 %v73
    %249 = vmatprep.subr.bf16.mxu0 0
    %250 = vmatpush1.bf16.msra.mxu0 0
    %251 = vmatprep.subr.bf16.mxu0 0
    %252 = vmatpush1.bf16.msra.mxu0 0
    %253 = vmatprep.subr.bf16.mxu0 0
    %254 = vmatpush1.bf16.msra.mxu0 0
    %255 = vmatprep.subr.bf16.mxu0 0
    %256 = vmatpush1.bf16.msra.mxu0 0
    %257 = vmatprep.subr.bf16.mxu0 0
    %258 = vmatpush1.bf16.msra.mxu0 0
    %259 = vmatprep.subr.bf16.mxu0 0
    %260 = vmatpush1.bf16.msra.mxu0 0
    %261 = vmatprep.subr.bf16.mxu0 0
    %262 = vmatpush1.bf16.msra.mxu0 0
    %263 = vmatprep.subr.bf16.mxu0 0
    %264 = vmatpush1.bf16.msra.mxu0 0
    %265 = vmatprep.subr.bf16.mxu0 0
    %266 = vmatpush1.bf16.msra.mxu0 0
    %267 = vmatprep.subr.bf16.mxu0 0
    %268 = vmatpush1.bf16.msra.mxu0 0
    %269 = vmatprep.subr.bf16.mxu0 0
    %270 = vmatpush1.bf16.msra.mxu0 0
    %271 = vmatprep.subr.bf16.mxu0 0
    %272 = vmatpush1.bf16.msra.mxu0 0
    %273 = vmatprep.subr.bf16.mxu0 0
    %274 = vmatpush1.bf16.msra.mxu0 0
    %275 = vmatprep.subr.bf16.mxu0 0
    %276 = vmatpush1.bf16.msra.mxu0 0
    %277 = vmatprep.mubr.bf16.mxu0 0
    %278 = vmatmul.mubr.bf16.gmra.mrb[0].mxu0 %v243
    %v279 = vpop.f32.mrb[0].mxu0
    %v280 = vadd.f32 %v59, %v279
    %v281 = vpop.f32.mrb[0].mxu0
    %v282 = vpop.f32.mrb[0].mxu0
    %v283 = vpop.f32.mrb[0].mxu0
    %284 = vdwg.mxu0
    %v285 = vadd.f32 %v237, %v280
    %v286 = vxor.u32 %v285, 2147483648
    %v287 = vmul.f32 %v286, 1.442695
    %v288 = vpow.pop %v287
    %v289 = vadd.f32 %v288, 1.0
    %v290 = vrcp.pop %v289
    %v291 = vmul.f32 1.0, %v290
    %293 = vrot.lane.b32.xlu0 %v280, 64
    %v294 = vpop.permute.xlu0 %293
    %v296 = vmul.f32 %v291, %v294
    %298 = vrot.lane.b32.xlu0 %v296, 64
    %v299 = vpop.permute.xlu0 %298
    %v301 = vadd.f32 %v237, %v299
    %v302 = vtanh.pop %v301
    %v303 = vsub.f32 1.0, %v291
    %305 = vrot.lane.b32.xlu0 %v302, 96
    %v306 = vpop.permute.xlu0 %305
    %v308 = vmul.f32 %v303, %v306
    %v309 = vmul.f32 %v291, %v229
    %v310 = vadd.f32 %v308, %v309
    %312 = vrot.lane.b32.xlu0 %v310, 96
    %v313 = vpop.permute.xlu0 %312
    %s315 = scalar_lea.vmem [#allocation8], 16
    %316 = vst.msk [vmem:[%s315] sm:$0xff] %vm76, %v313
    %s317 = scalar_lea.vmem [#allocation3], 24
    %v318 = vld [vmem:[%s317] sm:$0xff]
    %v319 = vpack.c.bf16 %v310, %v310
    %321 = vrot.lane.b32.xlu0 %v319, 96
    %v322 = vpop.permute.xlu0 %321
    %v324 = vsel %vm76, %v322, 0
    %326 = vmatprep.subr.bf16.mxu0 0
    %327 = vmatpush1.bf16.msra.mxu0 %v72
    %328 = vmatprep.subr.bf16.mxu0 0
    %329 = vmatpush1.bf16.msra.mxu0 %v73
    %330 = vmatprep.subr.bf16.mxu0 0
    %331 = vmatpush1.bf16.msra.mxu0 0
    %332 = vmatprep.subr.bf16.mxu0 0
    %333 = vmatpush1.bf16.msra.mxu0 0
    %334 = vmatprep.subr.bf16.mxu0 0
    %335 = vmatpush1.bf16.msra.mxu0 0
    %336 = vmatprep.subr.bf16.mxu0 0
    %337 = vmatpush1.bf16.msra.mxu0 0
    %338 = vmatprep.subr.bf16.mxu0 0
    %339 = vmatpush1.bf16.msra.mxu0 0
    %340 = vmatprep.subr.bf16.mxu0 0
    %341 = vmatpush1.bf16.msra.mxu0 0
    %342 = vmatprep.subr.bf16.mxu0 0
    %343 = vmatpush1.bf16.msra.mxu0 0
    %344 = vmatprep.subr.bf16.mxu0 0
    %345 = vmatpush1.bf16.msra.mxu0 0
    %346 = vmatprep.subr.bf16.mxu0 0
    %347 = vmatpush1.bf16.msra.mxu0 0
    %348 = vmatprep.subr.bf16.mxu0 0
    %349 = vmatpush1.bf16.msra.mxu0 0
    %350 = vmatprep.subr.bf16.mxu0 0
    %351 = vmatpush1.bf16.msra.mxu0 0
    %352 = vmatprep.subr.bf16.mxu0 0
    %353 = vmatpush1.bf16.msra.mxu0 0
    %354 = vmatprep.subr.bf16.mxu0 0
    %355 = vmatpush1.bf16.msra.mxu0 0
    %356 = vmatprep.subr.bf16.mxu0 0
    %357 = vmatpush1.bf16.msra.mxu0 0
    %358 = vmatprep.mubr.bf16.mxu0 0
    %359 = vmatmul.mubr.bf16.gmra.mrb[0].mxu0 %v324
    %v360 = vpop.f32.mrb[0].mxu0
    %v361 = vadd.f32 %v59, %v360
    %v362 = vpop.f32.mrb[0].mxu0
    %v363 = vpop.f32.mrb[0].mxu0
    %v364 = vpop.f32.mrb[0].mxu0
    %365 = vdwg.mxu0
    %v366 = vadd.f32 %v318, %v361
    %v367 = vxor.u32 %v366, 2147483648
    %v368 = vmul.f32 %v367, 1.442695
    %v369 = vpow.pop %v368
    %v370 = vadd.f32 %v369, 1.0
    %v371 = vrcp.pop %v370
    %v372 = vmul.f32 1.0, %v371
    %374 = vrot.lane.b32.xlu0 %v361, 64
    %v375 = vpop.permute.xlu0 %374
    %v377 = vmul.f32 %v372, %v375
    %379 = vrot.lane.b32.xlu0 %v377, 64
    %v380 = vpop.permute.xlu0 %379
    %v382 = vadd.f32 %v318, %v380
    %v383 = vtanh.pop %v382
    %v384 = vsub.f32 1.0, %v372
    %386 = vrot.lane.b32.xlu0 %v383, 96
    %v387 = vpop.permute.xlu0 %386
    %v389 = vmul.f32 %v384, %v387
    %v390 = vmul.f32 %v372, %v310
    %v391 = vadd.f32 %v389, %v390
    %393 = vrot.lane.b32.xlu0 %v391, 96
    %v394 = vpop.permute.xlu0 %393
    %s396 = scalar_lea.vmem [#allocation8], 24
    %397 = vst.msk [vmem:[%s396] sm:$0xff] %vm76, %v394
    %s398 = scalar_lea.vmem [#allocation3], 32
    %v399 = vld [vmem:[%s398] sm:$0xff]
    %v400 = vpack.c.bf16 %v391, %v391
    %402 = vrot.lane.b32.xlu0 %v400, 96
    %v403 = vpop.permute.xlu0 %402
    %v405 = vsel %vm76, %v403, 0
    %407 = vmatprep.subr.bf16.mxu0 0
    %408 = vmatpush1.bf16.msra.mxu0 %v72
    %409 = vmatprep.subr.bf16.mxu0 0
    %410 = vmatpush1.bf16.msra.mxu0 %v73
    %411 = vmatprep.subr.bf16.mxu0 0
    %412 = vmatpush1.bf16.msra.mxu0 0
    %413 = vmatprep.subr.bf16.mxu0 0
    %414 = vmatpush1.bf16.msra.mxu0 0
    %415 = vmatprep.subr.bf16.mxu0 0
    %416 = vmatpush1.bf16.msra.mxu0 0
    %417 = vmatprep.subr.bf16.mxu0 0
    %418 = vmatpush1.bf16.msra.mxu0 0
    %419 = vmatprep.subr.bf16.mxu0 0
    %420 = vmatpush1.bf16.msra.mxu0 0
    %421 = vmatprep.subr.bf16.mxu0 0
    %422 = vmatpush1.bf16.msra.mxu0 0
    %423 = vmatprep.subr.bf16.mxu0 0
    %424 = vmatpush1.bf16.msra.mxu0 0
    %425 = vmatprep.subr.bf16.mxu0 0
    %426 = vmatpush1.bf16.msra.mxu0 0
    %427 = vmatprep.subr.bf16.mxu0 0
    %428 = vmatpush1.bf16.msra.mxu0 0
    %429 = vmatprep.subr.bf16.mxu0 0
    %430 = vmatpush1.bf16.msra.mxu0 0
    %431 = vmatprep.subr.bf16.mxu0 0
    %432 = vmatpush1.bf16.msra.mxu0 0
    %433 = vmatprep.subr.bf16.mxu0 0
    %434 = vmatpush1.bf16.msra.mxu0 0
    %435 = vmatprep.subr.bf16.mxu0 0
    %436 = vmatpush1.bf16.msra.mxu0 0
    %437 = vmatprep.subr.bf16.mxu0 0
    %438 = vmatpush1.bf16.msra.mxu0 0
    %439 = vmatprep.mubr.bf16.mxu0 0
    %440 = vmatmul.mubr.bf16.gmra.mrb[0].mxu0 %v405
    %v441 = vpop.f32.mrb[0].mxu0
    %v442 = vadd.f32 %v59, %v441
    %v443 = vpop.f32.mrb[0].mxu0
    %v444 = vpop.f32.mrb[0].mxu0
    %v445 = vpop.f32.mrb[0].mxu0
    %446 = vdwg.mxu0
    %v447 = vadd.f32 %v399, %v442
    %v448 = vxor.u32 %v447, 2147483648
    %v449 = vmul.f32 %v448, 1.442695
    %v450 = vpow.pop %v449
    %v451 = vadd.f32 %v450, 1.0
    %v452 = vrcp.pop %v451
    %v453 = vmul.f32 1.0, %v452
    %455 = vrot.lane.b32.xlu0 %v442, 64
    %v456 = vpop.permute.xlu0 %455
    %v458 = vmul.f32 %v453, %v456
    %460 = vrot.lane.b32.xlu0 %v458, 64
    %v461 = vpop.permute.xlu0 %460
    %v463 = vadd.f32 %v399, %v461
    %v464 = vtanh.pop %v463
    %v465 = vsub.f32 1.0, %v453
    %467 = vrot.lane.b32.xlu0 %v464, 96
    %v468 = vpop.permute.xlu0 %467
    %v470 = vmul.f32 %v465, %v468
    %v471 = vmul.f32 %v453, %v391
    %v472 = vadd.f32 %v470, %v471
    %474 = vrot.lane.b32.xlu0 %v472, 96
    %v475 = vpop.permute.xlu0 %474
    %s477 = scalar_lea.vmem [#allocation8], 32
    %478 = vst.msk [vmem:[%s477] sm:$0xff] %vm76, %v475
    %s479 = scalar_lea.vmem [#allocation3], 40
    %v480 = vld [vmem:[%s479] sm:$0xff]
    %v481 = vpack.c.bf16 %v472, %v472
    %483 = vrot.lane.b32.xlu0 %v481, 96
    %v484 = vpop.permute.xlu0 %483
    %v486 = vsel %vm76, %v484, 0
    %488 = vmatprep.subr.bf16.mxu0 0
    %489 = vmatpush1.bf16.msra.mxu0 %v72
    %490 = vmatprep.subr.bf16.mxu0 0
    %491 = vmatpush1.bf16.msra.mxu0 %v73
    %492 = vmatprep.subr.bf16.mxu0 0
    %493 = vmatpush1.bf16.msra.mxu0 0
    %494 = vmatprep.subr.bf16.mxu0 0
    %495 = vmatpush1.bf16.msra.mxu0 0
    %496 = vmatprep.subr.bf16.mxu0 0
    %497 = vmatpush1.bf16.msra.mxu0 0
    %498 = vmatprep.subr.bf16.mxu0 0
    %499 = vmatpush1.bf16.msra.mxu0 0
    %500 = vmatprep.subr.bf16.mxu0 0
    %501 = vmatpush1.bf16.msra.mxu0 0
    %502 = vmatprep.subr.bf16.mxu0 0
    %503 = vmatpush1.bf16.msra.mxu0 0
    %504 = vmatprep.subr.bf16.mxu0 0
    %505 = vmatpush1.bf16.msra.mxu0 0
    %506 = vmatprep.subr.bf16.mxu0 0
    %507 = vmatpush1.bf16.msra.mxu0 0
    %508 = vmatprep.subr.bf16.mxu0 0
    %509 = vmatpush1.bf16.msra.mxu0 0
    %510 = vmatprep.subr.bf16.mxu0 0
    %511 = vmatpush1.bf16.msra.mxu0 0
    %512 = vmatprep.subr.bf16.mxu0 0
    %513 = vmatpush1.bf16.msra.mxu0 0
    %514 = vmatprep.subr.bf16.mxu0 0
    %515 = vmatpush1.bf16.msra.mxu0 0
    %516 = vmatprep.subr.bf16.mxu0 0
    %517 = vmatpush1.bf16.msra.mxu0 0
    %518 = vmatprep.subr.bf16.mxu0 0
    %519 = vmatpush1.bf16.msra.mxu0 0
    %520 = vmatprep.mubr.bf16.mxu0 0
    %521 = vmatmul.mubr.bf16.gmra.mrb[0].mxu0 %v486
    %v522 = vpop.f32.mrb[0].mxu0
    %v523 = vadd.f32 %v59, %v522
    %v524 = vpop.f32.mrb[0].mxu0
    %v525 = vpop.f32.mrb[0].mxu0
    %v526 = vpop.f32.mrb[0].mxu0
    %527 = vdwg.mxu0
    %v528 = vadd.f32 %v480, %v523
    %v529 = vxor.u32 %v528, 2147483648
    %v530 = vmul.f32 %v529, 1.442695
    %v531 = vpow.pop %v530
    %v532 = vadd.f32 %v531, 1.0
    %v533 = vrcp.pop %v532
    %v534 = vmul.f32 1.0, %v533
    %536 = vrot.lane.b32.xlu0 %v523, 64
    %v537 = vpop.permute.xlu0 %536
    %v539 = vmul.f32 %v534, %v537
    %541 = vrot.lane.b32.xlu0 %v539, 64
    %v542 = vpop.permute.xlu0 %541
    %v544 = vadd.f32 %v480, %v542
    %v545 = vtanh.pop %v544
    %v546 = vsub.f32 1.0, %v534
    %548 = vrot.lane.b32.xlu0 %v545, 96
    %v549 = vpop.permute.xlu0 %548
    %v551 = vmul.f32 %v546, %v549
    %v552 = vmul.f32 %v534, %v472
    %v553 = vadd.f32 %v551, %v552
    %555 = vrot.lane.b32.xlu0 %v553, 96
    %v556 = vpop.permute.xlu0 %555
    %s558 = scalar_lea.vmem [#allocation8], 40
    %559 = vst.msk [vmem:[%s558] sm:$0xff] %vm76, %v556
    %s560 = scalar_lea.vmem [#allocation3], 48
    %v561 = vld [vmem:[%s560] sm:$0xff]
    %v562 = vpack.c.bf16 %v553, %v553
    %564 = vrot.lane.b32.xlu0 %v562, 96
    %v565 = vpop.permute.xlu0 %564
    %v567 = vsel %vm76, %v565, 0
    %569 = vmatprep.subr.bf16.mxu0 0
    %570 = vmatpush1.bf16.msra.mxu0 %v72
    %571 = vmatprep.subr.bf16.mxu0 0
    %572 = vmatpush1.bf16.msra.mxu0 %v73
    %573 = vmatprep.subr.bf16.mxu0 0
    %574 = vmatpush1.bf16.msra.mxu0 0
    %575 = vmatprep.subr.bf16.mxu0 0
    %576 = vmatpush1.bf16.msra.mxu0 0
    %577 = vmatprep.subr.bf16.mxu0 0
    %578 = vmatpush1.bf16.msra.mxu0 0
    %579 = vmatprep.subr.bf16.mxu0 0
    %580 = vmatpush1.bf16.msra.mxu0 0
    %581 = vmatprep.subr.bf16.mxu0 0
    %582 = vmatpush1.bf16.msra.mxu0 0
    %583 = vmatprep.subr.bf16.mxu0 0
    %584 = vmatpush1.bf16.msra.mxu0 0
    %585 = vmatprep.subr.bf16.mxu0 0
    %586 = vmatpush1.bf16.msra.mxu0 0
    %587 = vmatprep.subr.bf16.mxu0 0
    %588 = vmatpush1.bf16.msra.mxu0 0
    %589 = vmatprep.subr.bf16.mxu0 0
    %590 = vmatpush1.bf16.msra.mxu0 0
    %591 = vmatprep.subr.bf16.mxu0 0
    %592 = vmatpush1.bf16.msra.mxu0 0
    %593 = vmatprep.subr.bf16.mxu0 0
    %594 = vmatpush1.bf16.msra.mxu0 0
    %595 = vmatprep.subr.bf16.mxu0 0
    %596 = vmatpush1.bf16.msra.mxu0 0
    %597 = vmatprep.subr.bf16.mxu0 0
    %598 = vmatpush1.bf16.msra.mxu0 0
    %599 = vmatprep.subr.bf16.mxu0 0
    %600 = vmatpush1.bf16.msra.mxu0 0
    %601 = vmatprep.mubr.bf16.mxu0 0
    %602 = vmatmul.mubr.bf16.gmra.mrb[0].mxu0 %v567
    %v603 = vpop.f32.mrb[0].mxu0
    %v604 = vadd.f32 %v59, %v603
    %v605 = vpop.f32.mrb[0].mxu0
    %v606 = vpop.f32.mrb[0].mxu0
    %v607 = vpop.f32.mrb[0].mxu0
    %608 = vdwg.mxu0
    %v609 = vadd.f32 %v561, %v604
    %v610 = vxor.u32 %v609, 2147483648
    %v611 = vmul.f32 %v610, 1.442695
    %v612 = vpow.pop %v611
    %v613 = vadd.f32 %v612, 1.0
    %v614 = vrcp.pop %v613
    %v615 = vmul.f32 1.0, %v614
    %617 = vrot.lane.b32.xlu0 %v604, 64
    %v618 = vpop.permute.xlu0 %617
    %v620 = vmul.f32 %v615, %v618
    %622 = vrot.lane.b32.xlu0 %v620, 64
    %v623 = vpop.permute.xlu0 %622
    %v625 = vadd.f32 %v561, %v623
    %v626 = vtanh.pop %v625
    %v627 = vsub.f32 1.0, %v615
    %629 = vrot.lane.b32.xlu0 %v626, 96
    %v630 = vpop.permute.xlu0 %629
    %v632 = vmul.f32 %v627, %v630
    %v633 = vmul.f32 %v615, %v553
    %v634 = vadd.f32 %v632, %v633
    %636 = vrot.lane.b32.xlu0 %v634, 96
    %v637 = vpop.permute.xlu0 %636
    %s639 = scalar_lea.vmem [#allocation8], 48
    %640 = vst.msk [vmem:[%s639] sm:$0xff] %vm76, %v637
    %s641 = scalar_lea.vmem [#allocation3], 56
    %v642 = vld [vmem:[%s641] sm:$0xff]
    %v643 = vpack.c.bf16 %v634, %v634
    %645 = vrot.lane.b32.xlu0 %v643, 96
    %v646 = vpop.permute.xlu0 %645
    %v648 = vsel %vm76, %v646, 0
    %650 = vmatprep.subr.bf16.mxu0 0
    %651 = vmatpush1.bf16.msra.mxu0 %v72
    %652 = vmatprep.subr.bf16.mxu0 0
    %653 = vmatpush1.bf16.msra.mxu0 %v73
    %654 = vmatprep.subr.bf16.mxu0 0
    %655 = vmatpush1.bf16.msra.mxu0 0
    %656 = vmatprep.subr.bf16.mxu0 0
    %657 = vmatpush1.bf16.msra.mxu0 0
    %658 = vmatprep.subr.bf16.mxu0 0
    %659 = vmatpush1.bf16.msra.mxu0 0
    %660 = vmatprep.subr.bf16.mxu0 0
    %661 = vmatpush1.bf16.msra.mxu0 0
    %662 = vmatprep.subr.bf16.mxu0 0
    %663 = vmatpush1.bf16.msra.mxu0 0
    %664 = vmatprep.subr.bf16.mxu0 0
    %665 = vmatpush1.bf16.msra.mxu0 0
    %666 = vmatprep.subr.bf16.mxu0 0
    %667 = vmatpush1.bf16.msra.mxu0 0
    %668 = vmatprep.subr.bf16.mxu0 0
    %669 = vmatpush1.bf16.msra.mxu0 0
    %670 = vmatprep.subr.bf16.mxu0 0
    %671 = vmatpush1.bf16.msra.mxu0 0
    %672 = vmatprep.subr.bf16.mxu0 0
    %673 = vmatpush1.bf16.msra.mxu0 0
    %674 = vmatprep.subr.bf16.mxu0 0
    %675 = vmatpush1.bf16.msra.mxu0 0
    %676 = vmatprep.subr.bf16.mxu0 0
    %677 = vmatpush1.bf16.msra.mxu0 0
    %678 = vmatprep.subr.bf16.mxu0 0
    %679 = vmatpush1.bf16.msra.mxu0 0
    %680 = vmatprep.subr.bf16.mxu0 0
    %681 = vmatpush1.bf16.msra.mxu0 0
    %682 = vmatprep.mubr.bf16.mxu0 0
    %683 = vmatmul.mubr.bf16.gmra.mrb[0].mxu0 %v648
    %v684 = vpop.f32.mrb[0].mxu0
    %v685 = vadd.f32 %v59, %v684
    %v686 = vpop.f32.mrb[0].mxu0
    %v687 = vpop.f32.mrb[0].mxu0
    %v688 = vpop.f32.mrb[0].mxu0
    %689 = vdwg.mxu0
    %v690 = vadd.f32 %v642, %v685
    %v691 = vxor.u32 %v690, 2147483648
    %v692 = vmul.f32 %v691, 1.442695
    %v693 = vpow.pop %v692
    %v694 = vadd.f32 %v693, 1.0
    %v695 = vrcp.pop %v694
    %v696 = vmul.f32 1.0, %v695
    %698 = vrot.lane.b32.xlu0 %v685, 64
    %v699 = vpop.permute.xlu0 %698
    %v701 = vmul.f32 %v696, %v699
    %703 = vrot.lane.b32.xlu0 %v701, 64
    %v704 = vpop.permute.xlu0 %703
    %v706 = vadd.f32 %v642, %v704
    %v707 = vtanh.pop %v706
    %v708 = vsub.f32 1.0, %v696
    %710 = vrot.lane.b32.xlu0 %v707, 96
    %v711 = vpop.permute.xlu0 %710
    %v713 = vmul.f32 %v708, %v711
    %v714 = vmul.f32 %v696, %v634
    %v715 = vadd.f32 %v713, %v714
    %717 = vrot.lane.b32.xlu0 %v715, 96
    %v718 = vpop.permute.xlu0 %717
    %s720 = scalar_lea.vmem [#allocation8], 56
    %721 = vst.msk [vmem:[%s720] sm:$0xff] %vm76, %v718
    %722 = vst.msk [vmem:[#allocation2] sm:$0xff] %vm76, %v718
    // Predicated region
    $region26: #{tpu_custom_call.1} parent=1 // pred_check
      _
    $region27: #{tpu_custom_call.1} parent=1 // pred_check_branch
      %724 = sbr.rel (0) target = $region29
    $region28: #{tpu_custom_call.1} parent=1 // pred_region
      %s726 = ssub.s32 1024, 1024
      %727 = vsyncadd [#allocation5], %s726
      %s728 = sshll.u32 [#allocation8], 4
      %s729 = int_to_ptr.vmem [resolvable:$true] %s728
      %734 = dma.vmem_to_hbm [thread:$0]  %s729, 1024, %s3, [#allocation5], 128, 128, 8
    $region29: #{tpu_custom_call.1} parent=1 // pred_fallthru
      _
    // Predicated region
    $region30: #{tpu_custom_call.1} parent=1 // pred_check
      _
    $region31: #{tpu_custom_call.1} parent=1 // pred_check_branch
      %736 = sbr.rel (0) target = $region33
    $region32: #{tpu_custom_call.1} parent=1 // pred_region
      %737 = dma.done [#allocation5], 1024
    $region33: #{tpu_custom_call.1} parent=1 // pred_fallthru
      _
    %738 = vsyncpa [#allocation4], 1
    %739 = vsyncpa [#allocation7], 1
    %740 = vsyncpa [#allocation5], 1

</llo_original>
